<compile_context>
chip_gen: v7x
topology: tpu7x:2x2x1
jax: 0.10.0
libtpu: 0.0.40
codegen_flags: <defaults>
</compile_context>

<pallas_src>
import functools

import jax
import jax.numpy as jnp
from jax.experimental import pallas as pl
from jax.experimental.pallas import tpu as pltpu

K_PAD = 128   # 9 * Cin <= 90 for every layer -> pad contraction dim to 128
C_PAD = 128   # Cout <= 10 -> pad output-channel (lane) dim to 128


def _round_up(a, b):
    return (a + b - 1) // b * b


def _choose_tile_m(m):
    # Tiles of up to 512 rows (multiple of 32 so bf16/f32 sublane tiling is
    # clean). Once there is enough work, prefer >= 2 grid steps so the v7x
    # megacore can split the M axis across both TensorCores.
    if m > 256:
        return min(512, _round_up((m + 1) // 2, 32))
    return _round_up(max(m, 8), 32)


# ---------------------------------------------------------------------------
# Pallas kernels
# ---------------------------------------------------------------------------
def _matmul_bias_relu_bn_kernel(x_ref, w_ref, b_ref, scale_ref, shift_ref, o_ref):
    # x_ref:     (TILE_M, K_PAD) bf16  im2col rows (one row per output pixel)
    # w_ref:     (K_PAD, C_PAD)  bf16  folded 3x3 weights, zero padded
    # b_ref:     (1, C_PAD)      f32   conv bias
    # scale_ref: (1, C_PAD)      f32   gamma / sqrt(var + eps)
    # shift_ref: (1, C_PAD)      f32   beta - mean * scale
    # o_ref:     (TILE_M, C_PAD) f32   lane-dense output
    acc = jnp.dot(x_ref[...], w_ref[...], preferred_element_type=jnp.float32)
    acc = acc + b_ref[...]
    acc = jnp.maximum(acc, 0.0)                       # ReLU before BN (module order)
    o_ref[...] = acc * scale_ref[...] + shift_ref[...]


def _matmul_logsoftmax_kernel(x_ref, w_ref, b_ref, o_ref, *, valid_cols):
    # Final conv9 (3x3 input -> 1x1 output, i.e. pure matmul over the batch)
    # fused with log_softmax over the 10 classes (padded lanes masked out).
    acc = jnp.dot(x_ref[...], w_ref[...], preferred_element_type=jnp.float32)
    acc = acc + b_ref[...]
    lane = jax.lax.broadcasted_iota(jnp.int32, acc.shape, 1)
    acc = jnp.where(lane < valid_cols, acc, -1e30)
    m = jnp.max(acc, axis=-1, keepdims=True)
    s = acc - m
    lse = jnp.log(jnp.sum(jnp.exp(s), axis=-1, keepdims=True))
    o_ref[...] = s - lse


# ---------------------------------------------------------------------------
# JAX glue (packing / pooling)
# ---------------------------------------------------------------------------
def _im2col_rows(x, pad):
    # x: (N, H, W, C) -> (N*Ho*Wo, 9*C). Column order is tap-major,
    # channel-minor, matching w.reshape(9*C, Cout) for HWIO weights.
    if pad:
        x = jnp.pad(x, ((0, 0), (pad, pad), (pad, pad), (0, 0)))
    n, hp, wp, c = x.shape
    ho, wo = hp - 2, wp - 2
    taps = [x[:, kh:kh + ho, kw:kw + wo, :] for kh in range(3) for kw in range(3)]
    rows = jnp.concatenate(taps, axis=-1).reshape(n * ho * wo, 9 * c)
    return rows, ho, wo


def _pack_operands(rows, w, m_pad):
    # rows: (M, K) f32; w: (3, 3, Cin, Cout) HWIO. Returns bf16 padded operands.
    m, k = rows.shape
    cout = w.shape[3]
    x_p = jnp.pad(rows.astype(jnp.bfloat16), ((0, m_pad - m), (0, K_PAD - k)))
    w_p = jnp.pad(w.reshape(k, cout).astype(jnp.bfloat16),
                  ((0, K_PAD - k), (0, C_PAD - cout)))
    return x_p, w_p


def _pad_vec(v):
    v = v.astype(jnp.float32).reshape(1, -1)
    return jnp.pad(v, ((0, 0), (0, C_PAD - v.shape[-1])))


def maxpool2(x):
    # 2x2 max pool, stride 2, floor-mode (matches nn.MaxPool2d(2, 2)).
    n, h, w, c = x.shape
    h2, w2 = h // 2, w // 2
    x = x[:, :h2 * 2, :w2 * 2, :]
    return x.reshape(n, h2, 2, w2, 2, c).max(axis=(2, 4))


def bn_affine(bn_params, eps=1e-5):
    gamma, beta, mean, var = bn_params
    scale = gamma / jnp.sqrt(var + eps)
    shift = beta - mean * scale
    return scale, shift


# ---------------------------------------------------------------------------
# Layer wrappers (pallas_call sites)
# ---------------------------------------------------------------------------
def conv_bn_relu(x, w, b, scale, shift, *, pad=1):
    # x: (N, H, W, Cin) NHWC f32; w: (3, 3, Cin, Cout) HWIO.
    n = x.shape[0]
    cout = w.shape[3]
    rows, ho, wo = _im2col_rows(x, pad)
    m = rows.shape[0]
    tile_m = _choose_tile_m(m)
    m_pad = _round_up(m, tile_m)
    x_p, w_p = _pack_operands(rows, w, m_pad)
    out = pl.pallas_call(
        _matmul_bias_relu_bn_kernel,
        out_shape=jax.ShapeDtypeStruct((m_pad, C_PAD), jnp.float32),
        grid_spec=pltpu.PrefetchScalarGridSpec(
            num_scalar_prefetch=0,
            grid=(m_pad // tile_m,),
            in_specs=[
                pl.BlockSpec((tile_m, K_PAD), lambda i: (i, 0)),
                pl.BlockSpec((K_PAD, C_PAD), lambda i: (0, 0)),
                pl.BlockSpec((1, C_PAD), lambda i: (0, 0)),
                pl.BlockSpec((1, C_PAD), lambda i: (0, 0)),
                pl.BlockSpec((1, C_PAD), lambda i: (0, 0)),
            ],
            out_specs=pl.BlockSpec((tile_m, C_PAD), lambda i: (i, 0)),
        ),
        compiler_params=pltpu.CompilerParams(
            dimension_semantics=("parallel",)),
    )(x_p, w_p, _pad_vec(b), _pad_vec(scale), _pad_vec(shift))
    return out[:m, :cout].reshape(n, ho, wo, cout)


def conv_logsoftmax(x, w, b):
    # Final 3x3 conv (no padding) on a 3x3 spatial input + fused log_softmax,
    # one batched matmul over all N images.
    n = x.shape[0]
    cout = w.shape[3]
    rows, ho, wo = _im2col_rows(x, 0)
    assert ho == 1 and wo == 1, "conv9 expects 3x3 spatial input"
    m = rows.shape[0]                      # == n
    tile_m = _choose_tile_m(m)
    m_pad = _round_up(m, tile_m)
    x_p, w_p = _pack_operands(rows, w, m_pad)
    out = pl.pallas_call(
        functools.partial(_matmul_logsoftmax_kernel, valid_cols=cout),
        out_shape=jax.ShapeDtypeStruct((m_pad, C_PAD), jnp.float32),
        grid_spec=pltpu.PrefetchScalarGridSpec(
            num_scalar_prefetch=0,
            grid=(m_pad // tile_m,),
            in_specs=[
                pl.BlockSpec((tile_m, K_PAD), lambda i: (i, 0)),
                pl.BlockSpec((K_PAD, C_PAD), lambda i: (0, 0)),
                pl.BlockSpec((1, C_PAD), lambda i: (0, 0)),
            ],
            out_specs=pl.BlockSpec((tile_m, C_PAD), lambda i: (i, 0)),
        ),
        compiler_params=pltpu.CompilerParams(
            dimension_semantics=("parallel",)),
    )(x_p, w_p, _pad_vec(b))
    return out[:m, :cout]


# ---------------------------------------------------------------------------
# Parameters & forward
# ---------------------------------------------------------------------------
def init_params(key):
    # (Cin, Cout) for conv1..conv9 per Net4.__init__ (set1=8, set2=10, out=10).
    # Weights are stored HWIO; a PyTorch (Cout, Cin, 3, 3) weight maps via
    # transpose(2, 3, 1, 0).
    specs = [(1, 8), (8, 8), (8, 10), (10, 10), (10, 10),
             (10, 10), (10, 10), (10, 10), (10, 10)]
    params = {}
    for idx, (cin, cout) in enumerate(specs, start=1):
        key, kw, kb = jax.random.split(key, 3)
        params[f"w{idx}"] = 0.1 * jax.random.normal(kw, (3, 3, cin, cout), jnp.float32)
        params[f"b{idx}"] = 0.05 * jax.random.normal(kb, (cout,), jnp.float32)
        if idx <= 8:  # bn1..bn8 used in forward (bn9 / gap are defined but unused)
            key, kg, kbeta, km, kv = jax.random.split(key, 5)
            gamma = 1.0 + 0.1 * jax.random.normal(kg, (cout,), jnp.float32)
            beta = 0.05 * jax.random.normal(kbeta, (cout,), jnp.float32)
            mean = 0.05 * jax.random.normal(km, (cout,), jnp.float32)
            var = 0.5 + jnp.abs(jax.random.normal(kv, (cout,), jnp.float32))
            params[f"bn{idx}"] = (gamma, beta, mean, var)
    return params


def net4_forward(params, x_nchw):
    # x_nchw: (N, 1, 28, 28) float32 -- same layout as the PyTorch module.
    x = jnp.transpose(x_nchw, (0, 2, 3, 1))  # NCHW -> NHWC

    # block 1: conv1 -> relu -> bn1 -> conv2 -> relu -> bn2 -> pool1 -> drop
    x = conv_bn_relu(x, params["w1"], params["b1"], *bn_affine(params["bn1"]))
    x = conv_bn_relu(x, params["w2"], params["b2"], *bn_affine(params["bn2"]))
    x = maxpool2(x)  # Dropout(0.3) is identity in eval mode

    # block 2
    x = conv_bn_relu(x, params["w3"], params["b3"], *bn_affine(params["bn3"]))
    x = conv_bn_relu(x, params["w4"], params["b4"], *bn_affine(params["bn4"]))
    x = maxpool2(x)

    # block 3
    x = conv_bn_relu(x, params["w5"], params["b5"], *bn_affine(params["bn5"]))
    x = conv_bn_relu(x, params["w6"], params["b6"], *bn_affine(params["bn6"]))
    x = maxpool2(x)

    # block 4 (no pooling)
    x = conv_bn_relu(x, params["w7"], params["b7"], *bn_affine(params["bn7"]))
    x = conv_bn_relu(x, params["w8"], params["b8"], *bn_affine(params["bn8"]))

    # TODO(synk): training-mode Dropout and BatchNorm batch statistics are not
    # modeled; this reproduces eval-mode semantics (running stats, no dropout).
    return conv_logsoftmax(x, params["w9"], params["b9"])


def _ref_forward(params, x_nchw):
    # Pure-JAX (XLA conv) reference used only for correctness checking.
    x = jnp.transpose(x_nchw, (0, 2, 3, 1))

    def conv(x, w, b, pad):
        y = jax.lax.conv_general_dilated(
            x, w, window_strides=(1, 1), padding=[(pad, pad), (pad, pad)],
            dimension_numbers=("NHWC", "HWIO", "NHWC"),
            precision=jax.lax.Precision.HIGHEST)
        return y + b

    def crb(x, i):
        scale, shift = bn_affine(params[f"bn{i}"])
        y = jnp.maximum(conv(x, params[f"w{i}"], params[f"b{i}"], 1), 0.0)
        return y * scale + shift

    x = crb(crb(x, 1), 2); x = maxpool2(x)
    x = crb(crb(x, 3), 4); x = maxpool2(x)
    x = crb(crb(x, 5), 6); x = maxpool2(x)
    x = crb(crb(x, 7), 8)
    y = conv(x, params["w9"], params["b9"], 0).reshape(-1, 10)
    return jax.nn.log_softmax(y, axis=-1)


if __name__ == "__main__":
    key = jax.random.PRNGKey(0)
    pkey, xkey = jax.random.split(key)
    params = init_params(pkey)
    # MNIST-shaped input implied by the forward (28x28 -> 14 -> 7 -> 3 -> 1x1).
    x = jax.random.normal(xkey, (2, 1, 28, 28), jnp.float32)
    out = jax.block_until_ready(jax.jit(net4_forward)(params, x))
    assert out.shape == (2, 10)
    # log_softmax rows should sum (in prob space) to ~1.
    assert jnp.allclose(jnp.exp(out).sum(axis=-1), 1.0, atol=1e-4)
    # Parity with the pure-JAX reference (loose tol: bf16 matmul operands).
    ref = jax.block_until_ready(_ref_forward(params, x))
    assert jnp.max(jnp.abs(out - ref)) < 0.1
    print("KERNEL_OK")
</pallas_src>

<mosaic_0001>
module attributes {stable_mosaic.version = 11 : i64} {
  func.func @_matmul_bias_relu_bn_kernel(%arg0: i32, %arg1: memref<512x128xbf16, #tpu.memory_space<vmem>>, %arg2: memref<128x128xbf16, #tpu.memory_space<vmem>>, %arg3: memref<1x128xf32, #tpu.memory_space<vmem>>, %arg4: memref<1x128xf32, #tpu.memory_space<vmem>>, %arg5: memref<1x128xf32, #tpu.memory_space<vmem>>, %arg6: memref<512x128xf32, #tpu.memory_space<vmem>>) attributes {dimension_semantics = [#tpu.dimension_semantics<parallel>], iteration_bounds = array<i64: 4>, scalar_prefetch = 0 : i64, scratch_operands = 0 : i64, tpu.core_type = #tpu.core_type<tc>, window_params = [{transform_indices = @transform_0, window_bounds = array<i64: 512, 128>}, {pipeline_mode = #tpu.pipeline_mode<synchronous>, transform_indices = @transform_1, window_bounds = array<i64: 128, 128>}, {pipeline_mode = #tpu.pipeline_mode<synchronous>, transform_indices = @transform_2, window_bounds = array<i64: 1, 128>}, {pipeline_mode = #tpu.pipeline_mode<synchronous>, transform_indices = @transform_3, window_bounds = array<i64: 1, 128>}, {pipeline_mode = #tpu.pipeline_mode<synchronous>, transform_indices = @transform_4, window_bounds = array<i64: 1, 128>}, {transform_indices = @transform_5, window_bounds = array<i64: 512, 128>}]} {
    %c0 = arith.constant 0 : index
    %c0_0 = arith.constant 0 : index
    %0 = vector.load %arg1[%c0, %c0_0] : memref<512x128xbf16, #tpu.memory_space<vmem>>, vector<512x128xbf16>
    %c0_1 = arith.constant 0 : index
    %c0_2 = arith.constant 0 : index
    %1 = vector.load %arg2[%c0_1, %c0_2] : memref<128x128xbf16, #tpu.memory_space<vmem>>, vector<128x128xbf16>
    %cst = arith.constant dense<0.000000e+00> : vector<512x128xf32>
    %2 = tpu.matmul %0, %1, %cst {dimension_numbers = #tpu.dot_dimension_numbers<[1], [0], [0], [1], [0, 0, 1, 1], [], []>} : vector<512x128xbf16>, vector<128x128xbf16>, vector<512x128xf32> -> vector<512x128xf32>
    %c0_3 = arith.constant 0 : index
    %c0_4 = arith.constant 0 : index
    %3 = vector.load %arg3[%c0_3, %c0_4] : memref<1x128xf32, #tpu.memory_space<vmem>>, vector<1x128xf32>
    %4 = vector.broadcast %3 : vector<1x128xf32> to vector<512x128xf32>
    %5 = arith.addf %2, %4 : vector<512x128xf32>
    %cst_5 = arith.constant 0.000000e+00 : f32
    %6 = vector.broadcast %cst_5 : f32 to vector<512x128xf32>
    %7 = arith.maximumf %5, %6 : vector<512x128xf32>
    %c0_6 = arith.constant 0 : index
    %c0_7 = arith.constant 0 : index
    %8 = vector.load %arg4[%c0_6, %c0_7] : memref<1x128xf32, #tpu.memory_space<vmem>>, vector<1x128xf32>
    %9 = vector.broadcast %8 : vector<1x128xf32> to vector<512x128xf32>
    %10 = arith.mulf %7, %9 : vector<512x128xf32>
    %c0_8 = arith.constant 0 : index
    %c0_9 = arith.constant 0 : index
    %11 = vector.load %arg5[%c0_8, %c0_9] : memref<1x128xf32, #tpu.memory_space<vmem>>, vector<1x128xf32>
    %12 = vector.broadcast %11 : vector<1x128xf32> to vector<512x128xf32>
    %13 = arith.addf %10, %12 : vector<512x128xf32>
    %c0_10 = arith.constant 0 : index
    %c0_11 = arith.constant 0 : index
    %14 = vector.load %arg6[%c0_10, %c0_11] : memref<512x128xf32, #tpu.memory_space<vmem>>, vector<512x128xf32>
    tpu.vector_store %arg6[%c0_10, %c0_11], %13 {strides = array<i32>} : memref<512x128xf32, #tpu.memory_space<vmem>>, vector<512x128xf32>,
    return
  }
  func.func @transform_0(%arg0: i32) -> (i32, i32) {
    %c0_i32 = arith.constant 0 : i32
    %c0_i32_0 = arith.constant 0 : i32
    return %arg0, %c0_i32 : i32, i32
  }
  func.func @transform_1(%arg0: i32) -> (i32, i32) {
    %c0_i32 = arith.constant 0 : i32
    %c0_i32_0 = arith.constant 0 : i32
    %c0_i32_1 = arith.constant 0 : i32
    return %c0_i32, %c0_i32_0 : i32, i32
  }
  func.func @transform_2(%arg0: i32) -> (i32, i32) {
    %c0_i32 = arith.constant 0 : i32
    %c0_i32_0 = arith.constant 0 : i32
    %c0_i32_1 = arith.constant 0 : i32
    return %c0_i32, %c0_i32_0 : i32, i32
  }
  func.func @transform_3(%arg0: i32) -> (i32, i32) {
    %c0_i32 = arith.constant 0 : i32
    %c0_i32_0 = arith.constant 0 : i32
    %c0_i32_1 = arith.constant 0 : i32
    return %c0_i32, %c0_i32_0 : i32, i32
  }
  func.func @transform_4(%arg0: i32) -> (i32, i32) {
    %c0_i32 = arith.constant 0 : i32
    %c0_i32_0 = arith.constant 0 : i32
    %c0_i32_1 = arith.constant 0 : i32
    return %c0_i32, %c0_i32_0 : i32, i32
  }
  func.func @transform_5(%arg0: i32) -> (i32, i32) {
    %c0_i32 = arith.constant 0 : i32
    %c0_i32_0 = arith.constant 0 : i32
    return %arg0, %c0_i32 : i32, i32
  }
}

module attributes {stable_mosaic.version = 11 : i64} {
  func.func @_matmul_bias_relu_bn_kernel(%arg0: i32, %arg1: memref<224x128xbf16, #tpu.memory_space<vmem>>, %arg2: memref<128x128xbf16, #tpu.memory_space<vmem>>, %arg3: memref<1x128xf32, #tpu.memory_space<vmem>>, %arg4: memref<1x128xf32, #tpu.memory_space<vmem>>, %arg5: memref<1x128xf32, #tpu.memory_space<vmem>>, %arg6: memref<224x128xf32, #tpu.memory_space<vmem>>) attributes {dimension_semantics = [#tpu.dimension_semantics<parallel>], iteration_bounds = array<i64: 2>, scalar_prefetch = 0 : i64, scratch_operands = 0 : i64, tpu.core_type = #tpu.core_type<tc>, window_params = [{transform_indices = @transform_0, window_bounds = array<i64: 224, 128>}, {pipeline_mode = #tpu.pipeline_mode<synchronous>, transform_indices = @transform_1, window_bounds = array<i64: 128, 128>}, {pipeline_mode = #tpu.pipeline_mode<synchronous>, transform_indices = @transform_2, window_bounds = array<i64: 1, 128>}, {pipeline_mode = #tpu.pipeline_mode<synchronous>, transform_indices = @transform_3, window_bounds = array<i64: 1, 128>}, {pipeline_mode = #tpu.pipeline_mode<synchronous>, transform_indices = @transform_4, window_bounds = array<i64: 1, 128>}, {transform_indices = @transform_5, window_bounds = array<i64: 224, 128>}]} {
    %c0 = arith.constant 0 : index
    %c0_0 = arith.constant 0 : index
    %0 = vector.load %arg1[%c0, %c0_0] : memref<224x128xbf16, #tpu.memory_space<vmem>>, vector<224x128xbf16>
    %c0_1 = arith.constant 0 : index
    %c0_2 = arith.constant 0 : index
    %1 = vector.load %arg2[%c0_1, %c0_2] : memref<128x128xbf16, #tpu.memory_space<vmem>>, vector<128x128xbf16>
    %cst = arith.constant dense<0.000000e+00> : vector<224x128xf32>
    %2 = tpu.matmul %0, %1, %cst {dimension_numbers = #tpu.dot_dimension_numbers<[1], [0], [0], [1], [0, 0, 1, 1], [], []>} : vector<224x128xbf16>, vector<128x128xbf16>, vector<224x128xf32> -> vector<224x128xf32>
    %c0_3 = arith.constant 0 : index
    %c0_4 = arith.constant 0 : index
    %3 = vector.load %arg3[%c0_3, %c0_4] : memref<1x128xf32, #tpu.memory_space<vmem>>, vector<1x128xf32>
    %4 = vector.broadcast %3 : vector<1x128xf32> to vector<224x128xf32>
    %5 = arith.addf %2, %4 : vector<224x128xf32>
    %cst_5 = arith.constant 0.000000e+00 : f32
    %6 = vector.broadcast %cst_5 : f32 to vector<224x128xf32>
    %7 = arith.maximumf %5, %6 : vector<224x128xf32>
    %c0_6 = arith.constant 0 : index
    %c0_7 = arith.constant 0 : index
    %8 = vector.load %arg4[%c0_6, %c0_7] : memref<1x128xf32, #tpu.memory_space<vmem>>, vector<1x128xf32>
    %9 = vector.broadcast %8 : vector<1x128xf32> to vector<224x128xf32>
    %10 = arith.mulf %7, %9 : vector<224x128xf32>
    %c0_8 = arith.constant 0 : index
    %c0_9 = arith.constant 0 : index
    %11 = vector.load %arg5[%c0_8, %c0_9] : memref<1x128xf32, #tpu.memory_space<vmem>>, vector<1x128xf32>
    %12 = vector.broadcast %11 : vector<1x128xf32> to vector<224x128xf32>
    %13 = arith.addf %10, %12 : vector<224x128xf32>
    %c0_10 = arith.constant 0 : index
    %c0_11 = arith.constant 0 : index
    %14 = vector.load %arg6[%c0_10, %c0_11] : memref<224x128xf32, #tpu.memory_space<vmem>>, vector<224x128xf32>
    tpu.vector_store %arg6[%c0_10, %c0_11], %13 {strides = array<i32>} : memref<224x128xf32, #tpu.memory_space<vmem>>, vector<224x128xf32>,
    return
  }
  func.func @transform_0(%arg0: i32) -> (i32, i32) {
    %c0_i32 = arith.constant 0 : i32
    %c0_i32_0 = arith.constant 0 : i32
    return %arg0, %c0_i32 : i32, i32
  }
  func.func @transform_1(%arg0: i32) -> (i32, i32) {
    %c0_i32 = arith.constant 0 : i32
    %c0_i32_0 = arith.constant 0 : i32
    %c0_i32_1 = arith.constant 0 : i32
    return %c0_i32, %c0_i32_0 : i32, i32
  }
  func.func @transform_2(%arg0: i32) -> (i32, i32) {
    %c0_i32 = arith.constant 0 : i32
    %c0_i32_0 = arith.constant 0 : i32
    %c0_i32_1 = arith.constant 0 : i32
    return %c0_i32, %c0_i32_0 : i32, i32
  }
  func.func @transform_3(%arg0: i32) -> (i32, i32) {
    %c0_i32 = arith.constant 0 : i32
    %c0_i32_0 = arith.constant 0 : i32
    %c0_i32_1 = arith.constant 0 : i32
    return %c0_i32, %c0_i32_0 : i32, i32
  }
  func.func @transform_4(%arg0: i32) -> (i32, i32) {
    %c0_i32 = arith.constant 0 : i32
    %c0_i32_0 = arith.constant 0 : i32
    %c0_i32_1 = arith.constant 0 : i32
    return %c0_i32, %c0_i32_0 : i32, i32
  }
  func.func @transform_5(%arg0: i32) -> (i32, i32) {
    %c0_i32 = arith.constant 0 : i32
    %c0_i32_0 = arith.constant 0 : i32
    return %arg0, %c0_i32 : i32, i32
  }
}

module attributes {stable_mosaic.version = 11 : i64} {
  func.func @_matmul_bias_relu_bn_kernel(%arg0: i32, %arg1: memref<128x128xbf16, #tpu.memory_space<vmem>>, %arg2: memref<128x128xbf16, #tpu.memory_space<vmem>>, %arg3: memref<1x128xf32, #tpu.memory_space<vmem>>, %arg4: memref<1x128xf32, #tpu.memory_space<vmem>>, %arg5: memref<1x128xf32, #tpu.memory_space<vmem>>, %arg6: memref<128x128xf32, #tpu.memory_space<vmem>>) attributes {dimension_semantics = [#tpu.dimension_semantics<parallel>], iteration_bounds = array<i64: 1>, scalar_prefetch = 0 : i64, scratch_operands = 0 : i64, tpu.core_type = #tpu.core_type<tc>, window_params = [{transform_indices = @transform_0, window_bounds = array<i64: 128, 128>}, {pipeline_mode = #tpu.pipeline_mode<synchronous>, transform_indices = @transform_1, window_bounds = array<i64: 128, 128>}, {pipeline_mode = #tpu.pipeline_mode<synchronous>, transform_indices = @transform_2, window_bounds = array<i64: 1, 128>}, {pipeline_mode = #tpu.pipeline_mode<synchronous>, transform_indices = @transform_3, window_bounds = array<i64: 1, 128>}, {pipeline_mode = #tpu.pipeline_mode<synchronous>, transform_indices = @transform_4, window_bounds = array<i64: 1, 128>}, {transform_indices = @transform_5, window_bounds = array<i64: 128, 128>}]} {
    %c0 = arith.constant 0 : index
    %c0_0 = arith.constant 0 : index
    %0 = vector.load %arg1[%c0, %c0_0] : memref<128x128xbf16, #tpu.memory_space<vmem>>, vector<128x128xbf16>
    %c0_1 = arith.constant 0 : index
    %c0_2 = arith.constant 0 : index
    %1 = vector.load %arg2[%c0_1, %c0_2] : memref<128x128xbf16, #tpu.memory_space<vmem>>, vector<128x128xbf16>
    %cst = arith.constant dense<0.000000e+00> : vector<128x128xf32>
    %2 = tpu.matmul %0, %1, %cst {dimension_numbers = #tpu.dot_dimension_numbers<[1], [0], [0], [1], [0, 0, 1, 1], [], []>} : vector<128x128xbf16>, vector<128x128xbf16>, vector<128x128xf32> -> vector<128x128xf32>
    %c0_3 = arith.constant 0 : index
    %c0_4 = arith.constant 0 : index
    %3 = vector.load %arg3[%c0_3, %c0_4] : memref<1x128xf32, #tpu.memory_space<vmem>>, vector<1x128xf32>
    %4 = vector.broadcast %3 : vector<1x128xf32> to vector<128x128xf32>
    %5 = arith.addf %2, %4 : vector<128x128xf32>
    %cst_5 = arith.constant 0.000000e+00 : f32
    %6 = vector.broadcast %cst_5 : f32 to vector<128x128xf32>
    %7 = arith.maximumf %5, %6 : vector<128x128xf32>
    %c0_6 = arith.constant 0 : index
    %c0_7 = arith.constant 0 : index
    %8 = vector.load %arg4[%c0_6, %c0_7] : memref<1x128xf32, #tpu.memory_space<vmem>>, vector<1x128xf32>
    %9 = vector.broadcast %8 : vector<1x128xf32> to vector<128x128xf32>
    %10 = arith.mulf %7, %9 : vector<128x128xf32>
    %c0_8 = arith.constant 0 : index
    %c0_9 = arith.constant 0 : index
    %11 = vector.load %arg5[%c0_8, %c0_9] : memref<1x128xf32, #tpu.memory_space<vmem>>, vector<1x128xf32>
    %12 = vector.broadcast %11 : vector<1x128xf32> to vector<128x128xf32>
    %13 = arith.addf %10, %12 : vector<128x128xf32>
    %c0_10 = arith.constant 0 : index
    %c0_11 = arith.constant 0 : index
    %14 = vector.load %arg6[%c0_10, %c0_11] : memref<128x128xf32, #tpu.memory_space<vmem>>, vector<128x128xf32>
    tpu.vector_store %arg6[%c0_10, %c0_11], %13 {strides = array<i32>} : memref<128x128xf32, #tpu.memory_space<vmem>>, vector<128x128xf32>,
    return
  }
  func.func @transform_0(%arg0: i32) -> (i32, i32) {
    %c0_i32 = arith.constant 0 : i32
    %c0_i32_0 = arith.constant 0 : i32
    return %arg0, %c0_i32 : i32, i32
  }
  func.func @transform_1(%arg0: i32) -> (i32, i32) {
    %c0_i32 = arith.constant 0 : i32
    %c0_i32_0 = arith.constant 0 : i32
    %c0_i32_1 = arith.constant 0 : i32
    return %c0_i32, %c0_i32_0 : i32, i32
  }
  func.func @transform_2(%arg0: i32) -> (i32, i32) {
    %c0_i32 = arith.constant 0 : i32
    %c0_i32_0 = arith.constant 0 : i32
    %c0_i32_1 = arith.constant 0 : i32
    return %c0_i32, %c0_i32_0 : i32, i32
  }
  func.func @transform_3(%arg0: i32) -> (i32, i32) {
    %c0_i32 = arith.constant 0 : i32
    %c0_i32_0 = arith.constant 0 : i32
    %c0_i32_1 = arith.constant 0 : i32
    return %c0_i32, %c0_i32_0 : i32, i32
  }
  func.func @transform_4(%arg0: i32) -> (i32, i32) {
    %c0_i32 = arith.constant 0 : i32
    %c0_i32_0 = arith.constant 0 : i32
    %c0_i32_1 = arith.constant 0 : i32
    return %c0_i32, %c0_i32_0 : i32, i32
  }
  func.func @transform_5(%arg0: i32) -> (i32, i32) {
    %c0_i32 = arith.constant 0 : i32
    %c0_i32_0 = arith.constant 0 : i32
    return %arg0, %c0_i32 : i32, i32
  }
}

module attributes {stable_mosaic.version = 11 : i64} {
  func.func @_matmul_bias_relu_bn_kernel(%arg0: i32, %arg1: memref<32x128xbf16, #tpu.memory_space<vmem>>, %arg2: memref<128x128xbf16, #tpu.memory_space<vmem>>, %arg3: memref<1x128xf32, #tpu.memory_space<vmem>>, %arg4: memref<1x128xf32, #tpu.memory_space<vmem>>, %arg5: memref<1x128xf32, #tpu.memory_space<vmem>>, %arg6: memref<32x128xf32, #tpu.memory_space<vmem>>) attributes {dimension_semantics = [#tpu.dimension_semantics<parallel>], iteration_bounds = array<i64: 1>, scalar_prefetch = 0 : i64, scratch_operands = 0 : i64, tpu.core_type = #tpu.core_type<tc>, window_params = [{transform_indices = @transform_0, window_bounds = array<i64: 32, 128>}, {pipeline_mode = #tpu.pipeline_mode<synchronous>, transform_indices = @transform_1, window_bounds = array<i64: 128, 128>}, {pipeline_mode = #tpu.pipeline_mode<synchronous>, transform_indices = @transform_2, window_bounds = array<i64: 1, 128>}, {pipeline_mode = #tpu.pipeline_mode<synchronous>, transform_indices = @transform_3, window_bounds = array<i64: 1, 128>}, {pipeline_mode = #tpu.pipeline_mode<synchronous>, transform_indices = @transform_4, window_bounds = array<i64: 1, 128>}, {transform_indices = @transform_5, window_bounds = array<i64: 32, 128>}]} {
    %c0 = arith.constant 0 : index
    %c0_0 = arith.constant 0 : index
    %0 = vector.load %arg1[%c0, %c0_0] : memref<32x128xbf16, #tpu.memory_space<vmem>>, vector<32x128xbf16>
    %c0_1 = arith.constant 0 : index
    %c0_2 = arith.constant 0 : index
    %1 = vector.load %arg2[%c0_1, %c0_2] : memref<128x128xbf16, #tpu.memory_space<vmem>>, vector<128x128xbf16>
    %cst = arith.constant dense<0.000000e+00> : vector<32x128xf32>
    %2 = tpu.matmul %0, %1, %cst {dimension_numbers = #tpu.dot_dimension_numbers<[1], [0], [0], [1], [0, 0, 1, 1], [], []>} : vector<32x128xbf16>, vector<128x128xbf16>, vector<32x128xf32> -> vector<32x128xf32>
    %c0_3 = arith.constant 0 : index
    %c0_4 = arith.constant 0 : index
    %3 = vector.load %arg3[%c0_3, %c0_4] : memref<1x128xf32, #tpu.memory_space<vmem>>, vector<1x128xf32>
    %4 = vector.broadcast %3 : vector<1x128xf32> to vector<32x128xf32>
    %5 = arith.addf %2, %4 : vector<32x128xf32>
    %cst_5 = arith.constant 0.000000e+00 : f32
    %6 = vector.broadcast %cst_5 : f32 to vector<32x128xf32>
    %7 = arith.maximumf %5, %6 : vector<32x128xf32>
    %c0_6 = arith.constant 0 : index
    %c0_7 = arith.constant 0 : index
    %8 = vector.load %arg4[%c0_6, %c0_7] : memref<1x128xf32, #tpu.memory_space<vmem>>, vector<1x128xf32>
    %9 = vector.broadcast %8 : vector<1x128xf32> to vector<32x128xf32>
    %10 = arith.mulf %7, %9 : vector<32x128xf32>
    %c0_8 = arith.constant 0 : index
    %c0_9 = arith.constant 0 : index
    %11 = vector.load %arg5[%c0_8, %c0_9] : memref<1x128xf32, #tpu.memory_space<vmem>>, vector<1x128xf32>
    %12 = vector.broadcast %11 : vector<1x128xf32> to vector<32x128xf32>
    %13 = arith.addf %10, %12 : vector<32x128xf32>
    %c0_10 = arith.constant 0 : index
    %c0_11 = arith.constant 0 : index
    %14 = vector.load %arg6[%c0_10, %c0_11] : memref<32x128xf32, #tpu.memory_space<vmem>>, vector<32x128xf32>
    tpu.vector_store %arg6[%c0_10, %c0_11], %13 {strides = array<i32>} : memref<32x128xf32, #tpu.memory_space<vmem>>, vector<32x128xf32>,
    return
  }
  func.func @transform_0(%arg0: i32) -> (i32, i32) {
    %c0_i32 = arith.constant 0 : i32
    %c0_i32_0 = arith.constant 0 : i32
    return %arg0, %c0_i32 : i32, i32
  }
  func.func @transform_1(%arg0: i32) -> (i32, i32) {
    %c0_i32 = arith.constant 0 : i32
    %c0_i32_0 = arith.constant 0 : i32
    %c0_i32_1 = arith.constant 0 : i32
    return %c0_i32, %c0_i32_0 : i32, i32
  }
  func.func @transform_2(%arg0: i32) -> (i32, i32) {
    %c0_i32 = arith.constant 0 : i32
    %c0_i32_0 = arith.constant 0 : i32
    %c0_i32_1 = arith.constant 0 : i32
    return %c0_i32, %c0_i32_0 : i32, i32
  }
  func.func @transform_3(%arg0: i32) -> (i32, i32) {
    %c0_i32 = arith.constant 0 : i32
    %c0_i32_0 = arith.constant 0 : i32
    %c0_i32_1 = arith.constant 0 : i32
    return %c0_i32, %c0_i32_0 : i32, i32
  }
  func.func @transform_4(%arg0: i32) -> (i32, i32) {
    %c0_i32 = arith.constant 0 : i32
    %c0_i32_0 = arith.constant 0 : i32
    %c0_i32_1 = arith.constant 0 : i32
    return %c0_i32, %c0_i32_0 : i32, i32
  }
  func.func @transform_5(%arg0: i32) -> (i32, i32) {
    %c0_i32 = arith.constant 0 : i32
    %c0_i32_0 = arith.constant 0 : i32
    return %arg0, %c0_i32 : i32, i32
  }
}

module attributes {stable_mosaic.version = 11 : i64} {
  func.func @_matmul_logsoftmax_kernel(%arg0: i32, %arg1: memref<32x128xbf16, #tpu.memory_space<vmem>>, %arg2: memref<128x128xbf16, #tpu.memory_space<vmem>>, %arg3: memref<1x128xf32, #tpu.memory_space<vmem>>, %arg4: memref<32x128xf32, #tpu.memory_space<vmem>>) attributes {dimension_semantics = [#tpu.dimension_semantics<parallel>], iteration_bounds = array<i64: 1>, scalar_prefetch = 0 : i64, scratch_operands = 0 : i64, tpu.core_type = #tpu.core_type<tc>, window_params = [{transform_indices = @transform_0, window_bounds = array<i64: 32, 128>}, {pipeline_mode = #tpu.pipeline_mode<synchronous>, transform_indices = @transform_1, window_bounds = array<i64: 128, 128>}, {pipeline_mode = #tpu.pipeline_mode<synchronous>, transform_indices = @transform_2, window_bounds = array<i64: 1, 128>}, {transform_indices = @transform_3, window_bounds = array<i64: 32, 128>}]} {
    %c0 = arith.constant 0 : index
    %c0_0 = arith.constant 0 : index
    %0 = vector.load %arg1[%c0, %c0_0] : memref<32x128xbf16, #tpu.memory_space<vmem>>, vector<32x128xbf16>
    %c0_1 = arith.constant 0 : index
    %c0_2 = arith.constant 0 : index
    %1 = vector.load %arg2[%c0_1, %c0_2] : memref<128x128xbf16, #tpu.memory_space<vmem>>, vector<128x128xbf16>
    %cst = arith.constant dense<0.000000e+00> : vector<32x128xf32>
    %2 = tpu.matmul %0, %1, %cst {dimension_numbers = #tpu.dot_dimension_numbers<[1], [0], [0], [1], [0, 0, 1, 1], [], []>} : vector<32x128xbf16>, vector<128x128xbf16>, vector<32x128xf32> -> vector<32x128xf32>
    %c0_3 = arith.constant 0 : index
    %c0_4 = arith.constant 0 : index
    %3 = vector.load %arg3[%c0_3, %c0_4] : memref<1x128xf32, #tpu.memory_space<vmem>>, vector<1x128xf32>
    %4 = vector.broadcast %3 : vector<1x128xf32> to vector<32x128xf32>
    %5 = arith.addf %2, %4 : vector<32x128xf32>
    %6 = tpu.iota {dimensions = array<i32: 1>} : vector<32x128xi32>
    %c10_i32 = arith.constant 10 : i32
    %7 = vector.broadcast %c10_i32 : i32 to vector<32x128xi32>
    %8 = arith.cmpi slt, %6, %7 : vector<32x128xi32>
    %cst_5 = arith.constant -1.000000e+30 : f32
    %9 = vector.broadcast %cst_5 : f32 to vector<32x128xf32>
    %10 = arith.select %8, %5, %9 : vector<32x128xi1>, vector<32x128xf32>
    %cst_6 = arith.constant dense<0xFF800000> : vector<32xf32>
    %11 = vector.multi_reduction <maximumf>, %10, %cst_6 [1] : vector<32x128xf32> to vector<32xf32>
    %12 = vector.shape_cast %11 : vector<32xf32> to vector<32x1xf32>
    %13 = vector.broadcast %12 : vector<32x1xf32> to vector<32x128xf32>
    %14 = arith.subf %10, %13 : vector<32x128xf32>
    %15 = math.exp %14 : vector<32x128xf32>
    %cst_7 = arith.constant dense<0.000000e+00> : vector<32xf32>
    %16 = vector.multi_reduction <add>, %15, %cst_7 [1] : vector<32x128xf32> to vector<32xf32>
    %17 = vector.shape_cast %16 : vector<32xf32> to vector<32x1xf32>
    %18 = math.log %17 : vector<32x1xf32>
    %19 = vector.broadcast %18 : vector<32x1xf32> to vector<32x128xf32>
    %20 = arith.subf %14, %19 : vector<32x128xf32>
    %c0_8 = arith.constant 0 : index
    %c0_9 = arith.constant 0 : index
    %21 = vector.load %arg4[%c0_8, %c0_9] : memref<32x128xf32, #tpu.memory_space<vmem>>, vector<32x128xf32>
    tpu.vector_store %arg4[%c0_8, %c0_9], %20 {strides = array<i32>} : memref<32x128xf32, #tpu.memory_space<vmem>>, vector<32x128xf32>,
    return
  }
  func.func @transform_0(%arg0: i32) -> (i32, i32) {
    %c0_i32 = arith.constant 0 : i32
    %c0_i32_0 = arith.constant 0 : i32
    return %arg0, %c0_i32 : i32, i32
  }
  func.func @transform_1(%arg0: i32) -> (i32, i32) {
    %c0_i32 = arith.constant 0 : i32
    %c0_i32_0 = arith.constant 0 : i32
    %c0_i32_1 = arith.constant 0 : i32
    return %c0_i32, %c0_i32_0 : i32, i32
  }
  func.func @transform_2(%arg0: i32) -> (i32, i32) {
    %c0_i32 = arith.constant 0 : i32
    %c0_i32_0 = arith.constant 0 : i32
    %c0_i32_1 = arith.constant 0 : i32
    return %c0_i32, %c0_i32_0 : i32, i32
  }
  func.func @transform_3(%arg0: i32) -> (i32, i32) {
    %c0_i32 = arith.constant 0 : i32
    %c0_i32_0 = arith.constant 0 : i32
    return %arg0, %c0_i32 : i32, i32
  }
}

</mosaic_0001>

<llo_original>
// kernel: net4_forward.9
$region0: #{net4_forward.9}
  #allocation0 [shape = 'u32[]', space=smem, size = 0x4, offset = 0x4, fixed_abs, tag = 'smem constant byte address 0x4 - core index']
  #allocation1 [shape = 'u32[144,128]{1,0:T(1,128)}', space=vmem, size = 0x12000, scoped, tag = 'internal scratch']
  %s0 = inlined_call_operand.vmem [shape: bf16[2048,128], index: 0, kind: input, shape index: {}]
  %s1 = inlined_call_operand.vmem [shape: bf16[128,128], index: 1, kind: input, shape index: {}]
  %s2 = inlined_call_operand.vmem [shape: f32[1,128], index: 2, kind: input, shape index: {}]
  %s3 = inlined_call_operand.vmem [shape: f32[1,128], index: 3, kind: input, shape index: {}]
  %s4 = inlined_call_operand.vmem [shape: f32[1,128], index: 4, kind: input, shape index: {}]
  %s5 = inlined_call_operand.vmem [shape: f32[2048,128], index: 5, kind: output, shape index: {}]
  %s6 = sld [smem:[#allocation0]]
  $region53: #{net4_forward.9} parent=0
    _
  %s8 = ssub.s32 1, %s6
  %s9 = scalar_select 0, %s8, %s6
  loop: start=0, step=1, limit=6
  $region2: #{net4_forward.9} parent=0 // loop_pre_header
    _
  $region3: #{net4_forward.9} parent=0 // loop_header
    %s11 = sphi 0, %s15
    %p12 = scmp.ge.s32.totalorder %s11, 6
    %s21 = sphi 0, %s23
    %s24 = sphi 0, %s21
    %s25 = sphi 0, %s24
    %s41 = sphi 0, %s25
    %s45 = sphi 0, %s45
    %s47 = sphi 0, %s45
    %s48 = sphi 0, %s47
    %s62 = sphi 0, %s48
    %s66 = sphi 0, %s66
    %s68 = sphi 0, %s66
    %s69 = sphi 0, %s68
    %s83 = sphi 0, %s69
    %s87 = sphi 0, %s87
    %s89 = sphi 0, %s87
    %s90 = sphi 0, %s89
    %s104 = sphi 0, %s90
    %s108 = sphi 0, %s108
    %s110 = sphi 0, %s108
    %s111 = sphi 0, %s110
    %s125 = sphi 0, %s111
    %s131 = sphi 0, %s133
    %s134 = sphi 0, %s131
    %s135 = sphi 0, %s134
    %s151 = sphi 0, %s135
  $region4: #{net4_forward.9} parent=0 // loop_header_branch
    %14 = sbr.rel (%p12) target = $region8
  $region5: #{net4_forward.9} parent=0 // loop_body
    %s16 = ssub.s32 %s11, 1
    %s17 = ssub.s32 %s11, 2
    %s18 = sadd.s32 %s11, 1
    %s19 = ssub.s32 %s11, %s18
    %p20 = scmp.eq.s32.totalorder %s19, 0
    %s22 = sadd.s32 %s21, 1
    %s23 = scalar_select %p20, %s21, %s22
    %p26 = pneg %p20
    %p27 = scmp.eq.s32.totalorder %s11, 3
    %p28 = por %p26, %p27
    %p29 = scmp.ne.s32.totalorder %s21, %s24
    %p30 = scmp.eq.s32.totalorder %s11, 0
    %p31 = por %p29, %p30
    %p32 = scmp.ne.s32.totalorder %s21, %s24
    %p33 = scmp.eq.s32.totalorder %s16, 3
    %p34 = por %p32, %p33
    %p35 = scmp.ne.s32.totalorder %s24, %s25
    %p36 = scmp.eq.s32.totalorder %s16, 0
    %p37 = por %p35, %p36
    %p38 = scmp.ne.s32.totalorder %s24, %s25
    %p39 = scmp.eq.s32.totalorder %s17, 3
    %p40 = por %p38, %p39
    %p42 = scmp.ne.s32.totalorder %s25, %s41
    %p43 = scmp.eq.s32.totalorder %s17, 0
    %p44 = por %p42, %p43
    %s46 = sadd.s32 %s45, 1
    %p49 = scmp.eq.s32.totalorder %s11, 3
    %p50 = scmp.ne.s32.totalorder %s45, %s47
    %p51 = scmp.eq.s32.totalorder %s11, 0
    %p52 = por %p50, %p51
    %p53 = scmp.ne.s32.totalorder %s45, %s47
    %p54 = scmp.eq.s32.totalorder %s16, 3
    %p55 = por %p53, %p54
    %p56 = scmp.ne.s32.totalorder %s47, %s48
    %p57 = scmp.eq.s32.totalorder %s16, 0
    %p58 = por %p56, %p57
    %p59 = scmp.ne.s32.totalorder %s47, %s48
    %p60 = scmp.eq.s32.totalorder %s17, 3
    %p61 = por %p59, %p60
    %p63 = scmp.ne.s32.totalorder %s48, %s62
    %p64 = scmp.eq.s32.totalorder %s17, 0
    %p65 = por %p63, %p64
    %s67 = sadd.s32 %s66, 1
    %p70 = scmp.eq.s32.totalorder %s11, 3
    %p71 = scmp.ne.s32.totalorder %s66, %s68
    %p72 = scmp.eq.s32.totalorder %s11, 0
    %p73 = por %p71, %p72
    %p74 = scmp.ne.s32.totalorder %s66, %s68
    %p75 = scmp.eq.s32.totalorder %s16, 3
    %p76 = por %p74, %p75
    %p77 = scmp.ne.s32.totalorder %s68, %s69
    %p78 = scmp.eq.s32.totalorder %s16, 0
    %p79 = por %p77, %p78
    %p80 = scmp.ne.s32.totalorder %s68, %s69
    %p81 = scmp.eq.s32.totalorder %s17, 3
    %p82 = por %p80, %p81
    %p84 = scmp.ne.s32.totalorder %s69, %s83
    %p85 = scmp.eq.s32.totalorder %s17, 0
    %p86 = por %p84, %p85
    %s88 = sadd.s32 %s87, 1
    %p91 = scmp.eq.s32.totalorder %s11, 3
    %p92 = scmp.ne.s32.totalorder %s87, %s89
    %p93 = scmp.eq.s32.totalorder %s11, 0
    %p94 = por %p92, %p93
    %p95 = scmp.ne.s32.totalorder %s87, %s89
    %p96 = scmp.eq.s32.totalorder %s16, 3
    %p97 = por %p95, %p96
    %p98 = scmp.ne.s32.totalorder %s89, %s90
    %p99 = scmp.eq.s32.totalorder %s16, 0
    %p100 = por %p98, %p99
    %p101 = scmp.ne.s32.totalorder %s89, %s90
    %p102 = scmp.eq.s32.totalorder %s17, 3
    %p103 = por %p101, %p102
    %p105 = scmp.ne.s32.totalorder %s90, %s104
    %p106 = scmp.eq.s32.totalorder %s17, 0
    %p107 = por %p105, %p106
    %s109 = sadd.s32 %s108, 1
    %p112 = scmp.eq.s32.totalorder %s11, 3
    %p113 = scmp.ne.s32.totalorder %s108, %s110
    %p114 = scmp.eq.s32.totalorder %s11, 0
    %p115 = por %p113, %p114
    %p116 = scmp.ne.s32.totalorder %s108, %s110
    %p117 = scmp.eq.s32.totalorder %s16, 3
    %p118 = por %p116, %p117
    %p119 = scmp.ne.s32.totalorder %s110, %s111
    %p120 = scmp.eq.s32.totalorder %s16, 0
    %p121 = por %p119, %p120
    %p122 = scmp.ne.s32.totalorder %s110, %s111
    %p123 = scmp.eq.s32.totalorder %s17, 3
    %p124 = por %p122, %p123
    %p126 = scmp.ne.s32.totalorder %s111, %s125
    %p127 = scmp.eq.s32.totalorder %s17, 0
    %p128 = por %p126, %p127
    %s129 = ssub.s32 %s11, %s18
    %p130 = scmp.eq.s32.totalorder %s129, 0
    %s132 = sadd.s32 %s131, 1
    %s133 = scalar_select %p130, %s131, %s132
    %p136 = pneg %p130
    %p137 = scmp.eq.s32.totalorder %s11, 3
    %p138 = por %p136, %p137
    %p139 = scmp.ne.s32.totalorder %s131, %s134
    %p140 = scmp.eq.s32.totalorder %s11, 0
    %p141 = por %p139, %p140
    %p142 = scmp.ne.s32.totalorder %s131, %s134
    %p143 = scmp.eq.s32.totalorder %s16, 3
    %p144 = por %p142, %p143
    %p145 = scmp.ne.s32.totalorder %s134, %s135
    %p146 = scmp.eq.s32.totalorder %s16, 0
    %p147 = por %p145, %p146
    %p148 = scmp.ne.s32.totalorder %s134, %s135
    %p149 = scmp.eq.s32.totalorder %s17, 3
    %p150 = por %p148, %p149
    %p152 = scmp.ne.s32.totalorder %s135, %s151
    %p153 = scmp.eq.s32.totalorder %s17, 0
    %p154 = por %p152, %p153
    %p155 = scmp.le.s32.totalorder 1, %s11
    %p156 = scmp.lt.s32.totalorder %s11, 5
    %p157 = pnand %p155, %p156
    %p158 = pneg %p157
    // Predicated region
    $region9: #{net4_forward.9} parent=5 // pred_check
      _
    $region10: #{net4_forward.9} parent=5 // pred_check_branch
      %160 = sbr.rel (%p157) target = $region12
    $region11: #{net4_forward.9} parent=5 // pred_region
      %s161 = ssub.s32 %s11, 1
      // Predicated region
      $region13: #{net4_forward.9} parent=11 // pred_check
        %p162 = pneg %p58
      $region14: #{net4_forward.9} parent=11 // pred_check_branch
        %164 = sbr.rel (%p162) target = $region16
      $region15: #{net4_forward.9} parent=11 // pred_region
        _
      $region16: #{net4_forward.9} parent=11 // pred_fallthru
        _
      // Predicated region
      $region17: #{net4_forward.9} parent=11 // pred_check
        %p165 = pneg %p79
      $region18: #{net4_forward.9} parent=11 // pred_check_branch
        %167 = sbr.rel (%p165) target = $region20
      $region19: #{net4_forward.9} parent=11 // pred_region
        _
      $region20: #{net4_forward.9} parent=11 // pred_fallthru
        _
      // Predicated region
      $region21: #{net4_forward.9} parent=11 // pred_check
        %p168 = pneg %p100
      $region22: #{net4_forward.9} parent=11 // pred_check_branch
        %170 = sbr.rel (%p168) target = $region24
      $region23: #{net4_forward.9} parent=11 // pred_region
        _
      $region24: #{net4_forward.9} parent=11 // pred_fallthru
        _
      // Predicated region
      $region25: #{net4_forward.9} parent=11 // pred_check
        %p171 = pneg %p121
      $region26: #{net4_forward.9} parent=11 // pred_check_branch
        %173 = sbr.rel (%p171) target = $region28
      $region27: #{net4_forward.9} parent=11 // pred_region
        _
      $region28: #{net4_forward.9} parent=11 // pred_fallthru
        _
    $region12: #{net4_forward.9} parent=5 // pred_fallthru
      _
    %p174 = scmp.lt.s32.totalorder %s11, 4
    // Predicated region
    $region29: #{net4_forward.9} parent=5 // pred_check
      %p175 = pneg %p174
    $region30: #{net4_forward.9} parent=5 // pred_check_branch
      %177 = sbr.rel (%p175) target = $region32
    $region31: #{net4_forward.9} parent=5 // pred_region
      // Predicated region
      $region33: #{net4_forward.9} parent=31 // pred_check
        %p178 = pneg %p31
      $region34: #{net4_forward.9} parent=31 // pred_check_branch
        %180 = sbr.rel (%p178) target = $region36
      $region35: #{net4_forward.9} parent=31 // pred_region
        %s181 = smul.u32 64, %s11
        %p182 = scmp.lt.s32.totalorder %s181, 255
        %s183 = scalar_select %p182, %s181, 255
        %s184 = smul.addr %s183, 4
        %s185 = scalar_lea.vmem %s0, %s184
        %s186 = smul.u32 64, %s11
      $region36: #{net4_forward.9} parent=31 // pred_fallthru
        _
    $region32: #{net4_forward.9} parent=5 // pred_fallthru
      _
    %p187 = scmp.le.s32.totalorder 1, %s11
    %p188 = scmp.lt.s32.totalorder %s11, 5
    %p189 = pnand %p187, %p188
    %p190 = pneg %p189
    // Predicated region
    $region37: #{net4_forward.9} parent=5 // pred_check
      _
    $region38: #{net4_forward.9} parent=5 // pred_check_branch
      %192 = sbr.rel (%p189) target = $region40
    $region39: #{net4_forward.9} parent=5 // pred_region
      %s193 = ssub.s32 %s11, 1
      %s194 = smul.u32 64, %s16
      %p195 = scmp.lt.s32.totalorder %s194, 255
      %s196 = scalar_select %p195, %s194, 255
      %s197 = smul.addr %s196, 4
      %s198 = scalar_lea.vmem %s0, %s197
      %p199 = pneg %p37
      %p200 = pneg %p34
      %p201 = pneg %p58
      %p202 = pneg %p55
      %p203 = pneg %p79
      %p204 = pneg %p76
      %p205 = pneg %p100
      %p206 = pneg %p97
      %p207 = pneg %p121
      %p208 = pneg %p118
      %p209 = pneg %p147
      %p210 = pneg %p144
      %s211 = smul.u32 64, %s16
      %p212 = scmp.lt.s32.totalorder %s211, 255
      %s213 = scalar_select %p212, %s211, 255
      %s214 = smul.addr %s213, 8
      %s215 = scalar_lea.vmem %s5, %s214
      %s216 = smul.u32 64, %s16
      %p217 = scmp.lt.s32.totalorder %s216, 255
      %s218 = scalar_select %p217, %s216, 255
      %s219 = smul.addr %s218, 4
      %s220 = scalar_lea.vmem %s0, %s219
      %s221 = smul.u32 64, %s16
      %s222 = smul.u32 64, %s16
      %p223 = scmp.lt.s32.totalorder %s222, 255
      %s224 = scalar_select %p223, %s222, 255
      %s225 = smul.addr %s224, 8
      %s226 = scalar_lea.vmem %s5, %s225
      %s227 = smul.u32 64, %s16
      %v229 = vld [vmem:[%s220] sm:$0xf]
      %v230 = vld [vmem:[%s220 + $0x4] sm:$0xf]
      %v231 = vld [vmem:[%s220 + $0x8] sm:$0xf]
      %v232 = vld [vmem:[%s220 + $0xc] sm:$0xf]
      %v233 = vld [vmem:[%s220 + $0x10] sm:$0xf]
      %v234 = vld [vmem:[%s220 + $0x14] sm:$0xf]
      %v235 = vld [vmem:[%s220 + $0x18] sm:$0xf]
      %v236 = vld [vmem:[%s220 + $0x1c] sm:$0xf]
      %v237 = vld [vmem:[%s220 + $0x20] sm:$0xf]
      %v238 = vld [vmem:[%s220 + $0x24] sm:$0xf]
      %v239 = vld [vmem:[%s220 + $0x28] sm:$0xf]
      %v240 = vld [vmem:[%s220 + $0x2c] sm:$0xf]
      %v241 = vld [vmem:[%s220 + $0x30] sm:$0xf]
      %v242 = vld [vmem:[%s220 + $0x34] sm:$0xf]
      %v243 = vld [vmem:[%s220 + $0x38] sm:$0xf]
      %v244 = vld [vmem:[%s220 + $0x3c] sm:$0xf]
      %v245 = vld [vmem:[%s220 + $0x40] sm:$0xf]
      %v246 = vld [vmem:[%s220 + $0x44] sm:$0xf]
      %v247 = vld [vmem:[%s220 + $0x48] sm:$0xf]
      %v248 = vld [vmem:[%s220 + $0x4c] sm:$0xf]
      %v249 = vld [vmem:[%s220 + $0x50] sm:$0xf]
      %v250 = vld [vmem:[%s220 + $0x54] sm:$0xf]
      %v251 = vld [vmem:[%s220 + $0x58] sm:$0xf]
      %v252 = vld [vmem:[%s220 + $0x5c] sm:$0xf]
      %v253 = vld [vmem:[%s220 + $0x60] sm:$0xf]
      %v254 = vld [vmem:[%s220 + $0x64] sm:$0xf]
      %v255 = vld [vmem:[%s220 + $0x68] sm:$0xf]
      %v256 = vld [vmem:[%s220 + $0x6c] sm:$0xf]
      %v257 = vld [vmem:[%s220 + $0x70] sm:$0xf]
      %v258 = vld [vmem:[%s220 + $0x74] sm:$0xf]
      %v259 = vld [vmem:[%s220 + $0x78] sm:$0xf]
      %v260 = vld [vmem:[%s220 + $0x7c] sm:$0xf]
      %v261 = vld [vmem:[%s220 + $0x80] sm:$0xf]
      %v262 = vld [vmem:[%s220 + $0x84] sm:$0xf]
      %v263 = vld [vmem:[%s220 + $0x88] sm:$0xf]
      %v264 = vld [vmem:[%s220 + $0x8c] sm:$0xf]
      %v265 = vld [vmem:[%s220 + $0x90] sm:$0xf]
      %v266 = vld [vmem:[%s220 + $0x94] sm:$0xf]
      %v267 = vld [vmem:[%s220 + $0x98] sm:$0xf]
      %v268 = vld [vmem:[%s220 + $0x9c] sm:$0xf]
      %v269 = vld [vmem:[%s220 + $0xa0] sm:$0xf]
      %v270 = vld [vmem:[%s220 + $0xa4] sm:$0xf]
      %v271 = vld [vmem:[%s220 + $0xa8] sm:$0xf]
      %v272 = vld [vmem:[%s220 + $0xac] sm:$0xf]
      %v273 = vld [vmem:[%s220 + $0xb0] sm:$0xf]
      %v274 = vld [vmem:[%s220 + $0xb4] sm:$0xf]
      %v275 = vld [vmem:[%s220 + $0xb8] sm:$0xf]
      %v276 = vld [vmem:[%s220 + $0xbc] sm:$0xf]
      %v277 = vld [vmem:[%s220 + $0xc0] sm:$0xf]
      %v278 = vld [vmem:[%s220 + $0xc4] sm:$0xf]
      %v279 = vld [vmem:[%s220 + $0xc8] sm:$0xf]
      %v280 = vld [vmem:[%s220 + $0xcc] sm:$0xf]
      %v281 = vld [vmem:[%s220 + $0xd0] sm:$0xf]
      %v282 = vld [vmem:[%s220 + $0xd4] sm:$0xf]
      %v283 = vld [vmem:[%s220 + $0xd8] sm:$0xf]
      %v284 = vld [vmem:[%s220 + $0xdc] sm:$0xf]
      %v285 = vld [vmem:[%s220 + $0xe0] sm:$0xf]
      %v286 = vld [vmem:[%s220 + $0xe4] sm:$0xf]
      %v287 = vld [vmem:[%s220 + $0xe8] sm:$0xf]
      %v288 = vld [vmem:[%s220 + $0xec] sm:$0xf]
      %v289 = vld [vmem:[%s220 + $0xf0] sm:$0xf]
      %v290 = vld [vmem:[%s220 + $0xf4] sm:$0xf]
      %v291 = vld [vmem:[%s220 + $0xf8] sm:$0xf]
      %v292 = vld [vmem:[%s220 + $0xfc] sm:$0xf]
      %v293 = vld [vmem:[%s1] sm:$0xf]
      %v294 = vld [vmem:[%s1 + $0x4] sm:$0xf]
      %v295 = vld [vmem:[%s1 + $0x8] sm:$0xf]
      %v296 = vld [vmem:[%s1 + $0xc] sm:$0xf]
      %v297 = vld [vmem:[%s1 + $0x10] sm:$0xf]
      %v298 = vld [vmem:[%s1 + $0x14] sm:$0xf]
      %v299 = vld [vmem:[%s1 + $0x18] sm:$0xf]
      %v300 = vld [vmem:[%s1 + $0x1c] sm:$0xf]
      %v301 = vld [vmem:[%s1 + $0x20] sm:$0xf]
      %v302 = vld [vmem:[%s1 + $0x24] sm:$0xf]
      %v303 = vld [vmem:[%s1 + $0x28] sm:$0xf]
      %v304 = vld [vmem:[%s1 + $0x2c] sm:$0xf]
      %v305 = vld [vmem:[%s1 + $0x30] sm:$0xf]
      %v306 = vld [vmem:[%s1 + $0x34] sm:$0xf]
      %v307 = vld [vmem:[%s1 + $0x38] sm:$0xf]
      %v308 = vld [vmem:[%s1 + $0x3c] sm:$0xf]
      %v309 = vld [vmem:[%s2] sm:$0x1]
      %v311 = vlaneseq
      %v312 = vshrl.u32 %v311, 7
      %v313 = vsub.s32 0, %v312
      %v314 = vrot.slane %v309, %v313
      %v380 = vunpack.c.l.b16 %v229
      %v381 = vunpack.c.l.b16 %v230
      %v382 = vunpack.c.l.b16 %v231
      %v383 = vunpack.c.l.b16 %v232
      %v384 = vunpack.c.l.b16 %v233
      %v385 = vunpack.c.l.b16 %v234
      %v386 = vunpack.c.l.b16 %v235
      %v387 = vunpack.c.l.b16 %v236
      %v388 = vunpack.c.l.b16 %v237
      %v389 = vunpack.c.l.b16 %v238
      %v390 = vunpack.c.l.b16 %v239
      %v391 = vunpack.c.l.b16 %v240
      %v392 = vunpack.c.l.b16 %v241
      %v393 = vunpack.c.l.b16 %v242
      %v394 = vunpack.c.l.b16 %v243
      %v395 = vunpack.c.l.b16 %v244
      %v396 = vunpack.c.l.b16 %v245
      %v397 = vunpack.c.l.b16 %v246
      %v398 = vunpack.c.l.b16 %v247
      %v399 = vunpack.c.l.b16 %v248
      %v400 = vunpack.c.l.b16 %v249
      %v401 = vunpack.c.l.b16 %v250
      %v402 = vunpack.c.l.b16 %v251
      %v403 = vunpack.c.l.b16 %v252
      %v404 = vunpack.c.l.b16 %v253
      %v405 = vunpack.c.l.b16 %v254
      %v406 = vunpack.c.l.b16 %v255
      %v407 = vunpack.c.l.b16 %v256
      %v408 = vunpack.c.l.b16 %v257
      %v409 = vunpack.c.l.b16 %v258
      %v410 = vunpack.c.l.b16 %v259
      %v411 = vunpack.c.l.b16 %v260
      %v412 = vunpack.c.l.b16 %v261
      %v413 = vunpack.c.l.b16 %v262
      %v414 = vunpack.c.l.b16 %v263
      %v415 = vunpack.c.l.b16 %v264
      %v416 = vunpack.c.l.b16 %v265
      %v417 = vunpack.c.l.b16 %v266
      %v418 = vunpack.c.l.b16 %v267
      %v419 = vunpack.c.l.b16 %v268
      %v420 = vunpack.c.l.b16 %v269
      %v421 = vunpack.c.l.b16 %v270
      %v422 = vunpack.c.l.b16 %v271
      %v423 = vunpack.c.l.b16 %v272
      %v424 = vunpack.c.l.b16 %v273
      %v425 = vunpack.c.l.b16 %v274
      %v426 = vunpack.c.l.b16 %v275
      %v427 = vunpack.c.l.b16 %v276
      %v428 = vunpack.c.l.b16 %v277
      %v429 = vunpack.c.l.b16 %v278
      %v430 = vunpack.c.l.b16 %v279
      %v431 = vunpack.c.l.b16 %v280
      %v432 = vunpack.c.l.b16 %v281
      %v433 = vunpack.c.l.b16 %v282
      %v434 = vunpack.c.l.b16 %v283
      %v435 = vunpack.c.l.b16 %v284
      %v436 = vunpack.c.l.b16 %v285
      %v437 = vunpack.c.l.b16 %v286
      %v438 = vunpack.c.l.b16 %v287
      %v439 = vunpack.c.l.b16 %v288
      %v440 = vunpack.c.l.b16 %v289
      %v441 = vunpack.c.l.b16 %v290
      %v442 = vunpack.c.l.b16 %v291
      %v443 = vunpack.c.l.b16 %v292
      %v444 = vpack.c.b16 %v381, %v380
      %v445 = vpack.c.b16 %v383, %v382
      %v446 = vpack.c.b16 %v385, %v384
      %v447 = vpack.c.b16 %v387, %v386
      %v448 = vpack.c.b16 %v389, %v388
      %v449 = vpack.c.b16 %v391, %v390
      %v450 = vpack.c.b16 %v393, %v392
      %v451 = vpack.c.b16 %v395, %v394
      %v452 = vpack.c.b16 %v397, %v396
      %v453 = vpack.c.b16 %v399, %v398
      %v454 = vpack.c.b16 %v401, %v400
      %v455 = vpack.c.b16 %v403, %v402
      %v456 = vpack.c.b16 %v405, %v404
      %v457 = vpack.c.b16 %v407, %v406
      %v458 = vpack.c.b16 %v409, %v408
      %v459 = vpack.c.b16 %v411, %v410
      %v460 = vpack.c.b16 %v413, %v412
      %v461 = vpack.c.b16 %v415, %v414
      %v462 = vpack.c.b16 %v417, %v416
      %v463 = vpack.c.b16 %v419, %v418
      %v464 = vpack.c.b16 %v421, %v420
      %v465 = vpack.c.b16 %v423, %v422
      %v466 = vpack.c.b16 %v425, %v424
      %v467 = vpack.c.b16 %v427, %v426
      %v468 = vpack.c.b16 %v429, %v428
      %v469 = vpack.c.b16 %v431, %v430
      %v470 = vpack.c.b16 %v433, %v432
      %v471 = vpack.c.b16 %v435, %v434
      %v472 = vpack.c.b16 %v437, %v436
      %v473 = vpack.c.b16 %v439, %v438
      %v474 = vpack.c.b16 %v441, %v440
      %v475 = vpack.c.b16 %v443, %v442
      %v524 = vunpack.c.l.b16 %v293
      %v525 = vunpack.c.l.b16 %v294
      %v526 = vunpack.c.l.b16 %v295
      %v527 = vunpack.c.l.b16 %v296
      %v528 = vunpack.c.l.b16 %v297
      %v529 = vunpack.c.l.b16 %v298
      %v530 = vunpack.c.l.b16 %v299
      %v531 = vunpack.c.l.b16 %v300
      %v532 = vunpack.c.l.b16 %v301
      %v533 = vunpack.c.l.b16 %v302
      %v534 = vunpack.c.l.b16 %v303
      %v535 = vunpack.c.l.b16 %v304
      %v536 = vunpack.c.l.b16 %v305
      %v537 = vunpack.c.l.b16 %v306
      %v538 = vunpack.c.l.b16 %v307
      %v539 = vunpack.c.l.b16 %v308
      %v540 = vpack.c.b16 %v525, %v524
      %v541 = vpack.c.b16 %v527, %v526
      %v542 = vpack.c.b16 %v529, %v528
      %v543 = vpack.c.b16 %v531, %v530
      %v544 = vpack.c.b16 %v533, %v532
      %v545 = vpack.c.b16 %v535, %v534
      %v546 = vpack.c.b16 %v537, %v536
      %v547 = vpack.c.b16 %v539, %v538
      %556 = vmatprep.subr.bf16.mxu0 0
      %557 = vmatpush1.bf16.msra.mxu0 %v540
      %558 = vmatprep.subr.bf16.mxu0 0
      %559 = vmatpush1.bf16.msra.mxu0 %v541
      %560 = vmatprep.subr.bf16.mxu0 0
      %561 = vmatpush1.bf16.msra.mxu0 %v542
      %562 = vmatprep.subr.bf16.mxu0 0
      %563 = vmatpush1.bf16.msra.mxu0 %v543
      %564 = vmatprep.subr.bf16.mxu0 0
      %565 = vmatpush1.bf16.msra.mxu0 %v544
      %566 = vmatprep.subr.bf16.mxu0 0
      %567 = vmatpush1.bf16.msra.mxu0 %v545
      %568 = vmatprep.subr.bf16.mxu0 0
      %569 = vmatpush1.bf16.msra.mxu0 %v546
      %570 = vmatprep.subr.bf16.mxu0 0
      %571 = vmatpush1.bf16.msra.mxu0 %v547
      %572 = vmatprep.subr.bf16.mxu0 0
      %573 = vmatpush1.bf16.msra.mxu0 0
      %574 = vmatprep.subr.bf16.mxu0 0
      %575 = vmatpush1.bf16.msra.mxu0 0
      %576 = vmatprep.subr.bf16.mxu0 0
      %577 = vmatpush1.bf16.msra.mxu0 0
      %578 = vmatprep.subr.bf16.mxu0 0
      %579 = vmatpush1.bf16.msra.mxu0 0
      %580 = vmatprep.subr.bf16.mxu0 0
      %581 = vmatpush1.bf16.msra.mxu0 0
      %582 = vmatprep.subr.bf16.mxu0 0
      %583 = vmatpush1.bf16.msra.mxu0 0
      %584 = vmatprep.subr.bf16.mxu0 0
      %585 = vmatpush1.bf16.msra.mxu0 0
      %586 = vmatprep.subr.bf16.mxu0 0
      %587 = vmatpush1.bf16.msra.mxu0 0
      %588 = vmatprep.mubr.bf16.mxu0 0
      %589 = vmatmul.mubr.bf16.gmra.mrb[0].mxu0 %v444
      %v590 = vpop.f32.mrb[0].mxu0
      %v591 = vadd.f32 %v314, %v590
      %v592 = vpop.f32.mrb[0].mxu0
      %v593 = vpop.f32.mrb[0].mxu0
      %v594 = vadd.f32 %v314, %v593
      %v595 = vpop.f32.mrb[0].mxu0
      %596 = vmatprep.mubr.bf16.mxu0 0
      %597 = vmatmul.mubr.bf16.gmra.mrb[0].mxu0 %v445
      %v598 = vpop.f32.mrb[0].mxu0
      %v599 = vadd.f32 %v314, %v598
      %v600 = vpop.f32.mrb[0].mxu0
      %v601 = vpop.f32.mrb[0].mxu0
      %v602 = vadd.f32 %v314, %v601
      %v603 = vpop.f32.mrb[0].mxu0
      %604 = vmatprep.mubr.bf16.mxu0 0
      %605 = vmatmul.mubr.bf16.gmra.mrb[0].mxu0 %v446
      %v606 = vpop.f32.mrb[0].mxu0
      %v607 = vadd.f32 %v314, %v606
      %v608 = vpop.f32.mrb[0].mxu0
      %v609 = vpop.f32.mrb[0].mxu0
      %v610 = vadd.f32 %v314, %v609
      %v611 = vpop.f32.mrb[0].mxu0
      %612 = vmatprep.mubr.bf16.mxu0 0
      %613 = vmatmul.mubr.bf16.gmra.mrb[0].mxu0 %v447
      %v614 = vpop.f32.mrb[0].mxu0
      %v615 = vadd.f32 %v314, %v614
      %v616 = vpop.f32.mrb[0].mxu0
      %v617 = vpop.f32.mrb[0].mxu0
      %v618 = vadd.f32 %v314, %v617
      %v619 = vpop.f32.mrb[0].mxu0
      %620 = vmatprep.mubr.bf16.mxu0 0
      %621 = vmatmul.mubr.bf16.gmra.mrb[0].mxu0 %v448
      %v622 = vpop.f32.mrb[0].mxu0
      %v623 = vadd.f32 %v314, %v622
      %v624 = vpop.f32.mrb[0].mxu0
      %v625 = vpop.f32.mrb[0].mxu0
      %v626 = vadd.f32 %v314, %v625
      %v627 = vpop.f32.mrb[0].mxu0
      %628 = vmatprep.mubr.bf16.mxu0 0
      %629 = vmatmul.mubr.bf16.gmra.mrb[0].mxu0 %v449
      %v630 = vpop.f32.mrb[0].mxu0
      %v631 = vadd.f32 %v314, %v630
      %v632 = vpop.f32.mrb[0].mxu0
      %v633 = vpop.f32.mrb[0].mxu0
      %v634 = vadd.f32 %v314, %v633
      %v635 = vpop.f32.mrb[0].mxu0
      %636 = vmatprep.mubr.bf16.mxu0 0
      %637 = vmatmul.mubr.bf16.gmra.mrb[0].mxu0 %v450
      %v638 = vpop.f32.mrb[0].mxu0
      %v639 = vadd.f32 %v314, %v638
      %v640 = vpop.f32.mrb[0].mxu0
      %v641 = vpop.f32.mrb[0].mxu0
      %v642 = vadd.f32 %v314, %v641
      %v643 = vpop.f32.mrb[0].mxu0
      %644 = vmatprep.mubr.bf16.mxu0 0
      %645 = vmatmul.mubr.bf16.gmra.mrb[0].mxu0 %v451
      %v646 = vpop.f32.mrb[0].mxu0
      %v647 = vadd.f32 %v314, %v646
      %v648 = vpop.f32.mrb[0].mxu0
      %v649 = vpop.f32.mrb[0].mxu0
      %v650 = vadd.f32 %v314, %v649
      %v651 = vpop.f32.mrb[0].mxu0
      %652 = vmatprep.mubr.bf16.mxu0 0
      %653 = vmatmul.mubr.bf16.gmra.mrb[0].mxu0 %v452
      %v654 = vpop.f32.mrb[0].mxu0
      %v655 = vadd.f32 %v314, %v654
      %v656 = vpop.f32.mrb[0].mxu0
      %v657 = vpop.f32.mrb[0].mxu0
      %v658 = vadd.f32 %v314, %v657
      %v659 = vpop.f32.mrb[0].mxu0
      %660 = vmatprep.mubr.bf16.mxu0 0
      %661 = vmatmul.mubr.bf16.gmra.mrb[0].mxu0 %v453
      %v662 = vpop.f32.mrb[0].mxu0
      %v663 = vadd.f32 %v314, %v662
      %v664 = vpop.f32.mrb[0].mxu0
      %v665 = vpop.f32.mrb[0].mxu0
      %v666 = vadd.f32 %v314, %v665
      %v667 = vpop.f32.mrb[0].mxu0
      %668 = vmatprep.mubr.bf16.mxu0 0
      %669 = vmatmul.mubr.bf16.gmra.mrb[0].mxu0 %v454
      %v670 = vpop.f32.mrb[0].mxu0
      %v671 = vadd.f32 %v314, %v670
      %v672 = vpop.f32.mrb[0].mxu0
      %v673 = vpop.f32.mrb[0].mxu0
      %v674 = vadd.f32 %v314, %v673
      %v675 = vpop.f32.mrb[0].mxu0
      %676 = vmatprep.mubr.bf16.mxu0 0
      %677 = vmatmul.mubr.bf16.gmra.mrb[0].mxu0 %v455
      %v678 = vpop.f32.mrb[0].mxu0
      %v679 = vadd.f32 %v314, %v678
      %v680 = vpop.f32.mrb[0].mxu0
      %v681 = vpop.f32.mrb[0].mxu0
      %v682 = vadd.f32 %v314, %v681
      %v683 = vpop.f32.mrb[0].mxu0
      %684 = vmatprep.mubr.bf16.mxu0 0
      %685 = vmatmul.mubr.bf16.gmra.mrb[0].mxu0 %v456
      %v686 = vpop.f32.mrb[0].mxu0
      %v687 = vadd.f32 %v314, %v686
      %v688 = vpop.f32.mrb[0].mxu0
      %v689 = vpop.f32.mrb[0].mxu0
      %v690 = vadd.f32 %v314, %v689
      %v691 = vpop.f32.mrb[0].mxu0
      %692 = vmatprep.mubr.bf16.mxu0 0
      %693 = vmatmul.mubr.bf16.gmra.mrb[0].mxu0 %v457
      %v694 = vpop.f32.mrb[0].mxu0
      %v695 = vadd.f32 %v314, %v694
      %v696 = vpop.f32.mrb[0].mxu0
      %v697 = vpop.f32.mrb[0].mxu0
      %v698 = vadd.f32 %v314, %v697
      %v699 = vpop.f32.mrb[0].mxu0
      %700 = vmatprep.mubr.bf16.mxu0 0
      %701 = vmatmul.mubr.bf16.gmra.mrb[0].mxu0 %v458
      %v702 = vpop.f32.mrb[0].mxu0
      %v703 = vadd.f32 %v314, %v702
      %v704 = vpop.f32.mrb[0].mxu0
      %v705 = vpop.f32.mrb[0].mxu0
      %v706 = vadd.f32 %v314, %v705
      %v707 = vpop.f32.mrb[0].mxu0
      %708 = vmatprep.mubr.bf16.mxu0 0
      %709 = vmatmul.mubr.bf16.gmra.mrb[0].mxu0 %v459
      %v710 = vpop.f32.mrb[0].mxu0
      %v711 = vadd.f32 %v314, %v710
      %v712 = vpop.f32.mrb[0].mxu0
      %v713 = vpop.f32.mrb[0].mxu0
      %v714 = vadd.f32 %v314, %v713
      %v715 = vpop.f32.mrb[0].mxu0
      %716 = vmatprep.mubr.bf16.mxu0 0
      %717 = vmatmul.mubr.bf16.gmra.mrb[0].mxu0 %v460
      %v718 = vpop.f32.mrb[0].mxu0
      %v719 = vadd.f32 %v314, %v718
      %v720 = vpop.f32.mrb[0].mxu0
      %v721 = vpop.f32.mrb[0].mxu0
      %v722 = vadd.f32 %v314, %v721
      %v723 = vpop.f32.mrb[0].mxu0
      %724 = vmatprep.mubr.bf16.mxu0 0
      %725 = vmatmul.mubr.bf16.gmra.mrb[0].mxu0 %v461
      %v726 = vpop.f32.mrb[0].mxu0
      %v727 = vadd.f32 %v314, %v726
      %v728 = vpop.f32.mrb[0].mxu0
      %v729 = vpop.f32.mrb[0].mxu0
      %v730 = vadd.f32 %v314, %v729
      %v731 = vpop.f32.mrb[0].mxu0
      %732 = vmatprep.mubr.bf16.mxu0 0
      %733 = vmatmul.mubr.bf16.gmra.mrb[0].mxu0 %v462
      %v734 = vpop.f32.mrb[0].mxu0
      %v735 = vadd.f32 %v314, %v734
      %v736 = vpop.f32.mrb[0].mxu0
      %v737 = vpop.f32.mrb[0].mxu0
      %v738 = vadd.f32 %v314, %v737
      %v739 = vpop.f32.mrb[0].mxu0
      %740 = vmatprep.mubr.bf16.mxu0 0
      %741 = vmatmul.mubr.bf16.gmra.mrb[0].mxu0 %v463
      %v742 = vpop.f32.mrb[0].mxu0
      %v743 = vadd.f32 %v314, %v742
      %v744 = vpop.f32.mrb[0].mxu0
      %v745 = vpop.f32.mrb[0].mxu0
      %v746 = vadd.f32 %v314, %v745
      %v747 = vpop.f32.mrb[0].mxu0
      %748 = vmatprep.mubr.bf16.mxu0 0
      %749 = vmatmul.mubr.bf16.gmra.mrb[0].mxu0 %v464
      %v750 = vpop.f32.mrb[0].mxu0
      %v751 = vadd.f32 %v314, %v750
      %v752 = vpop.f32.mrb[0].mxu0
      %v753 = vpop.f32.mrb[0].mxu0
      %v754 = vadd.f32 %v314, %v753
      %v755 = vpop.f32.mrb[0].mxu0
      %756 = vmatprep.mubr.bf16.mxu0 0
      %757 = vmatmul.mubr.bf16.gmra.mrb[0].mxu0 %v465
      %v758 = vpop.f32.mrb[0].mxu0
      %v759 = vadd.f32 %v314, %v758
      %v760 = vpop.f32.mrb[0].mxu0
      %v761 = vpop.f32.mrb[0].mxu0
      %v762 = vadd.f32 %v314, %v761
      %v763 = vpop.f32.mrb[0].mxu0
      %764 = vmatprep.mubr.bf16.mxu0 0
      %765 = vmatmul.mubr.bf16.gmra.mrb[0].mxu0 %v466
      %v766 = vpop.f32.mrb[0].mxu0
      %v767 = vadd.f32 %v314, %v766
      %v768 = vpop.f32.mrb[0].mxu0
      %v769 = vpop.f32.mrb[0].mxu0
      %v770 = vadd.f32 %v314, %v769
      %v771 = vpop.f32.mrb[0].mxu0
      %772 = vmatprep.mubr.bf16.mxu0 0
      %773 = vmatmul.mubr.bf16.gmra.mrb[0].mxu0 %v467
      %v774 = vpop.f32.mrb[0].mxu0
      %v775 = vadd.f32 %v314, %v774
      %v776 = vpop.f32.mrb[0].mxu0
      %v777 = vpop.f32.mrb[0].mxu0
      %v778 = vadd.f32 %v314, %v777
      %v779 = vpop.f32.mrb[0].mxu0
      %780 = vmatprep.mubr.bf16.mxu0 0
      %781 = vmatmul.mubr.bf16.gmra.mrb[0].mxu0 %v468
      %v782 = vpop.f32.mrb[0].mxu0
      %v783 = vadd.f32 %v314, %v782
      %v784 = vpop.f32.mrb[0].mxu0
      %v785 = vpop.f32.mrb[0].mxu0
      %v786 = vadd.f32 %v314, %v785
      %v787 = vpop.f32.mrb[0].mxu0
      %788 = vmatprep.mubr.bf16.mxu0 0
      %789 = vmatmul.mubr.bf16.gmra.mrb[0].mxu0 %v469
      %v790 = vpop.f32.mrb[0].mxu0
      %v791 = vadd.f32 %v314, %v790
      %v792 = vpop.f32.mrb[0].mxu0
      %v793 = vpop.f32.mrb[0].mxu0
      %v794 = vadd.f32 %v314, %v793
      %v795 = vpop.f32.mrb[0].mxu0
      %796 = vmatprep.mubr.bf16.mxu0 0
      %797 = vmatmul.mubr.bf16.gmra.mrb[0].mxu0 %v470
      %v798 = vpop.f32.mrb[0].mxu0
      %v799 = vadd.f32 %v314, %v798
      %v800 = vpop.f32.mrb[0].mxu0
      %v801 = vpop.f32.mrb[0].mxu0
      %v802 = vadd.f32 %v314, %v801
      %v803 = vpop.f32.mrb[0].mxu0
      %804 = vmatprep.mubr.bf16.mxu0 0
      %805 = vmatmul.mubr.bf16.gmra.mrb[0].mxu0 %v471
      %v806 = vpop.f32.mrb[0].mxu0
      %v807 = vadd.f32 %v314, %v806
      %v808 = vpop.f32.mrb[0].mxu0
      %v809 = vpop.f32.mrb[0].mxu0
      %v810 = vadd.f32 %v314, %v809
      %v811 = vpop.f32.mrb[0].mxu0
      %812 = vmatprep.mubr.bf16.mxu0 0
      %813 = vmatmul.mubr.bf16.gmra.mrb[0].mxu0 %v472
      %v814 = vpop.f32.mrb[0].mxu0
      %v815 = vadd.f32 %v314, %v814
      %v816 = vpop.f32.mrb[0].mxu0
      %v817 = vpop.f32.mrb[0].mxu0
      %v818 = vadd.f32 %v314, %v817
      %v819 = vpop.f32.mrb[0].mxu0
      %820 = vmatprep.mubr.bf16.mxu0 0
      %821 = vmatmul.mubr.bf16.gmra.mrb[0].mxu0 %v473
      %v822 = vpop.f32.mrb[0].mxu0
      %v823 = vadd.f32 %v314, %v822
      %v824 = vpop.f32.mrb[0].mxu0
      %v825 = vpop.f32.mrb[0].mxu0
      %v826 = vadd.f32 %v314, %v825
      %v827 = vpop.f32.mrb[0].mxu0
      %828 = vmatprep.mubr.bf16.mxu0 0
      %829 = vmatmul.mubr.bf16.gmra.mrb[0].mxu0 %v474
      %v830 = vpop.f32.mrb[0].mxu0
      %v831 = vadd.f32 %v314, %v830
      %v832 = vpop.f32.mrb[0].mxu0
      %v833 = vpop.f32.mrb[0].mxu0
      %v834 = vadd.f32 %v314, %v833
      %v835 = vpop.f32.mrb[0].mxu0
      %836 = vmatprep.mubr.bf16.mxu0 0
      %837 = vmatmul.mubr.bf16.gmra.mrb[0].mxu0 %v475
      %v838 = vpop.f32.mrb[0].mxu0
      %v839 = vadd.f32 %v314, %v838
      %v840 = vpop.f32.mrb[0].mxu0
      %v841 = vpop.f32.mrb[0].mxu0
      %v842 = vadd.f32 %v314, %v841
      %v843 = vpop.f32.mrb[0].mxu0
      %844 = vdwg.mxu0
      %v845 = vmax.f32 %v591, 0.0
      %v846 = vmax.f32 %v594, 0.0
      %v847 = vmax.f32 %v599, 0.0
      %v848 = vmax.f32 %v602, 0.0
      %v849 = vmax.f32 %v607, 0.0
      %v850 = vmax.f32 %v610, 0.0
      %v851 = vmax.f32 %v615, 0.0
      %v852 = vmax.f32 %v618, 0.0
      %v853 = vmax.f32 %v623, 0.0
      %v854 = vmax.f32 %v626, 0.0
      %v855 = vmax.f32 %v631, 0.0
      %v856 = vmax.f32 %v634, 0.0
      %v857 = vmax.f32 %v639, 0.0
      %v858 = vmax.f32 %v642, 0.0
      %v859 = vmax.f32 %v647, 0.0
      %v860 = vmax.f32 %v650, 0.0
      %v861 = vmax.f32 %v655, 0.0
      %v862 = vmax.f32 %v658, 0.0
      %v863 = vmax.f32 %v663, 0.0
      %v864 = vmax.f32 %v666, 0.0
      %v865 = vmax.f32 %v671, 0.0
      %v866 = vmax.f32 %v674, 0.0
      %v867 = vmax.f32 %v679, 0.0
      %v868 = vmax.f32 %v682, 0.0
      %v869 = vmax.f32 %v687, 0.0
      %v870 = vmax.f32 %v690, 0.0
      %v871 = vmax.f32 %v695, 0.0
      %v872 = vmax.f32 %v698, 0.0
      %v873 = vmax.f32 %v703, 0.0
      %v874 = vmax.f32 %v706, 0.0
      %v875 = vmax.f32 %v711, 0.0
      %v876 = vmax.f32 %v714, 0.0
      %v877 = vmax.f32 %v719, 0.0
      %v878 = vmax.f32 %v722, 0.0
      %v879 = vmax.f32 %v727, 0.0
      %v880 = vmax.f32 %v730, 0.0
      %v881 = vmax.f32 %v735, 0.0
      %v882 = vmax.f32 %v738, 0.0
      %v883 = vmax.f32 %v743, 0.0
      %v884 = vmax.f32 %v746, 0.0
      %v885 = vmax.f32 %v751, 0.0
      %v886 = vmax.f32 %v754, 0.0
      %v887 = vmax.f32 %v759, 0.0
      %v888 = vmax.f32 %v762, 0.0
      %v889 = vmax.f32 %v767, 0.0
      %v890 = vmax.f32 %v770, 0.0
      %v891 = vmax.f32 %v775, 0.0
      %v892 = vmax.f32 %v778, 0.0
      %v893 = vmax.f32 %v783, 0.0
      %v894 = vmax.f32 %v786, 0.0
      %v895 = vmax.f32 %v791, 0.0
      %v896 = vmax.f32 %v794, 0.0
      %v897 = vmax.f32 %v799, 0.0
      %v898 = vmax.f32 %v802, 0.0
      %v899 = vmax.f32 %v807, 0.0
      %v900 = vmax.f32 %v810, 0.0
      %v901 = vmax.f32 %v815, 0.0
      %v902 = vmax.f32 %v818, 0.0
      %v903 = vmax.f32 %v823, 0.0
      %v904 = vmax.f32 %v826, 0.0
      %v905 = vmax.f32 %v831, 0.0
      %v906 = vmax.f32 %v834, 0.0
      %v907 = vmax.f32 %v839, 0.0
      %v908 = vmax.f32 %v842, 0.0
      %v909 = vld [vmem:[%s3] sm:$0x1]
      %v911 = vlaneseq
      %v912 = vshrl.u32 %v911, 7
      %v913 = vsub.s32 0, %v912
      %v914 = vrot.slane %v909, %v913
      %v916 = vmul.f32 %v845, %v914
      %v917 = vmul.f32 %v846, %v914
      %v918 = vmul.f32 %v847, %v914
      %v919 = vmul.f32 %v848, %v914
      %v920 = vmul.f32 %v849, %v914
      %v921 = vmul.f32 %v850, %v914
      %v922 = vmul.f32 %v851, %v914
      %v923 = vmul.f32 %v852, %v914
      %v924 = vmul.f32 %v853, %v914
      %v925 = vmul.f32 %v854, %v914
      %v926 = vmul.f32 %v855, %v914
      %v927 = vmul.f32 %v856, %v914
      %v928 = vmul.f32 %v857, %v914
      %v929 = vmul.f32 %v858, %v914
      %v930 = vmul.f32 %v859, %v914
      %v931 = vmul.f32 %v860, %v914
      %v932 = vmul.f32 %v861, %v914
      %v933 = vmul.f32 %v862, %v914
      %v934 = vmul.f32 %v863, %v914
      %v935 = vmul.f32 %v864, %v914
      %v936 = vmul.f32 %v865, %v914
      %v937 = vmul.f32 %v866, %v914
      %v938 = vmul.f32 %v867, %v914
      %v939 = vmul.f32 %v868, %v914
      %v940 = vmul.f32 %v869, %v914
      %v941 = vmul.f32 %v870, %v914
      %v942 = vmul.f32 %v871, %v914
      %v943 = vmul.f32 %v872, %v914
      %v944 = vmul.f32 %v873, %v914
      %v945 = vmul.f32 %v874, %v914
      %v946 = vmul.f32 %v875, %v914
      %v947 = vmul.f32 %v876, %v914
      %v948 = vmul.f32 %v877, %v914
      %v949 = vmul.f32 %v878, %v914
      %v950 = vmul.f32 %v879, %v914
      %v951 = vmul.f32 %v880, %v914
      %v952 = vmul.f32 %v881, %v914
      %v953 = vmul.f32 %v882, %v914
      %v954 = vmul.f32 %v883, %v914
      %v955 = vmul.f32 %v884, %v914
      %v956 = vmul.f32 %v885, %v914
      %v957 = vmul.f32 %v886, %v914
      %v958 = vmul.f32 %v887, %v914
      %v959 = vmul.f32 %v888, %v914
      %v960 = vmul.f32 %v889, %v914
      %v961 = vmul.f32 %v890, %v914
      %v962 = vmul.f32 %v891, %v914
      %v963 = vmul.f32 %v892, %v914
      %v964 = vmul.f32 %v893, %v914
      %v965 = vmul.f32 %v894, %v914
      %v966 = vmul.f32 %v895, %v914
      %v967 = vmul.f32 %v896, %v914
      %v968 = vmul.f32 %v897, %v914
      %v969 = vmul.f32 %v898, %v914
      %v970 = vmul.f32 %v899, %v914
      %v971 = vmul.f32 %v900, %v914
      %v972 = vmul.f32 %v901, %v914
      %v973 = vmul.f32 %v902, %v914
      %v974 = vmul.f32 %v903, %v914
      %v975 = vmul.f32 %v904, %v914
      %v976 = vmul.f32 %v905, %v914
      %v977 = vmul.f32 %v906, %v914
      %v978 = vmul.f32 %v907, %v914
      %v979 = vmul.f32 %v908, %v914
      %v980 = vld [vmem:[%s4] sm:$0x1]
      %v982 = vlaneseq
      %v983 = vshrl.u32 %v982, 7
      %v984 = vsub.s32 0, %v983
      %v985 = vrot.slane %v980, %v984
      %v987 = vadd.f32 %v916, %v985
      %v988 = vadd.f32 %v917, %v985
      %v989 = vadd.f32 %v918, %v985
      %v990 = vadd.f32 %v919, %v985
      %v991 = vadd.f32 %v920, %v985
      %v992 = vadd.f32 %v921, %v985
      %v993 = vadd.f32 %v922, %v985
      %v994 = vadd.f32 %v923, %v985
      %v995 = vadd.f32 %v924, %v985
      %v996 = vadd.f32 %v925, %v985
      %v997 = vadd.f32 %v926, %v985
      %v998 = vadd.f32 %v927, %v985
      %v999 = vadd.f32 %v928, %v985
      %v1000 = vadd.f32 %v929, %v985
      %v1001 = vadd.f32 %v930, %v985
      %v1002 = vadd.f32 %v931, %v985
      %v1003 = vadd.f32 %v932, %v985
      %v1004 = vadd.f32 %v933, %v985
      %v1005 = vadd.f32 %v934, %v985
      %v1006 = vadd.f32 %v935, %v985
      %v1007 = vadd.f32 %v936, %v985
      %v1008 = vadd.f32 %v937, %v985
      %v1009 = vadd.f32 %v938, %v985
      %v1010 = vadd.f32 %v939, %v985
      %v1011 = vadd.f32 %v940, %v985
      %v1012 = vadd.f32 %v941, %v985
      %v1013 = vadd.f32 %v942, %v985
      %v1014 = vadd.f32 %v943, %v985
      %v1015 = vadd.f32 %v944, %v985
      %v1016 = vadd.f32 %v945, %v985
      %v1017 = vadd.f32 %v946, %v985
      %v1018 = vadd.f32 %v947, %v985
      %v1019 = vadd.f32 %v948, %v985
      %v1020 = vadd.f32 %v949, %v985
      %v1021 = vadd.f32 %v950, %v985
      %v1022 = vadd.f32 %v951, %v985
      %v1023 = vadd.f32 %v952, %v985
      %v1024 = vadd.f32 %v953, %v985
      %v1025 = vadd.f32 %v954, %v985
      %v1026 = vadd.f32 %v955, %v985
      %v1027 = vadd.f32 %v956, %v985
      %v1028 = vadd.f32 %v957, %v985
      %v1029 = vadd.f32 %v958, %v985
      %v1030 = vadd.f32 %v959, %v985
      %v1031 = vadd.f32 %v960, %v985
      %v1032 = vadd.f32 %v961, %v985
      %v1033 = vadd.f32 %v962, %v985
      %v1034 = vadd.f32 %v963, %v985
      %v1035 = vadd.f32 %v964, %v985
      %v1036 = vadd.f32 %v965, %v985
      %v1037 = vadd.f32 %v966, %v985
      %v1038 = vadd.f32 %v967, %v985
      %v1039 = vadd.f32 %v968, %v985
      %v1040 = vadd.f32 %v969, %v985
      %v1041 = vadd.f32 %v970, %v985
      %v1042 = vadd.f32 %v971, %v985
      %v1043 = vadd.f32 %v972, %v985
      %v1044 = vadd.f32 %v973, %v985
      %v1045 = vadd.f32 %v974, %v985
      %v1046 = vadd.f32 %v975, %v985
      %v1047 = vadd.f32 %v976, %v985
      %v1048 = vadd.f32 %v977, %v985
      %v1049 = vadd.f32 %v978, %v985
      %v1050 = vadd.f32 %v979, %v985
      %1051 = vst [vmem:[%s226] sm:$0xff] %v987
      %1052 = vst [vmem:[%s226 + $0x8] sm:$0xff] %v988
      %1053 = vst [vmem:[%s226 + $0x10] sm:$0xff] %v989
      %1054 = vst [vmem:[%s226 + $0x18] sm:$0xff] %v990
      %1055 = vst [vmem:[%s226 + $0x20] sm:$0xff] %v991
      %1056 = vst [vmem:[%s226 + $0x28] sm:$0xff] %v992
      %1057 = vst [vmem:[%s226 + $0x30] sm:$0xff] %v993
      %1058 = vst [vmem:[%s226 + $0x38] sm:$0xff] %v994
      %1059 = vst [vmem:[%s226 + $0x40] sm:$0xff] %v995
      %1060 = vst [vmem:[%s226 + $0x48] sm:$0xff] %v996
      %1061 = vst [vmem:[%s226 + $0x50] sm:$0xff] %v997
      %1062 = vst [vmem:[%s226 + $0x58] sm:$0xff] %v998
      %1063 = vst [vmem:[%s226 + $0x60] sm:$0xff] %v999
      %1064 = vst [vmem:[%s226 + $0x68] sm:$0xff] %v1000
      %1065 = vst [vmem:[%s226 + $0x70] sm:$0xff] %v1001
      %1066 = vst [vmem:[%s226 + $0x78] sm:$0xff] %v1002
      %1067 = vst [vmem:[%s226 + $0x80] sm:$0xff] %v1003
      %1068 = vst [vmem:[%s226 + $0x88] sm:$0xff] %v1004
      %1069 = vst [vmem:[%s226 + $0x90] sm:$0xff] %v1005
      %1070 = vst [vmem:[%s226 + $0x98] sm:$0xff] %v1006
      %1071 = vst [vmem:[%s226 + $0xa0] sm:$0xff] %v1007
      %1072 = vst [vmem:[%s226 + $0xa8] sm:$0xff] %v1008
      %1073 = vst [vmem:[%s226 + $0xb0] sm:$0xff] %v1009
      %1074 = vst [vmem:[%s226 + $0xb8] sm:$0xff] %v1010
      %1075 = vst [vmem:[%s226 + $0xc0] sm:$0xff] %v1011
      %1076 = vst [vmem:[%s226 + $0xc8] sm:$0xff] %v1012
      %1077 = vst [vmem:[%s226 + $0xd0] sm:$0xff] %v1013
      %1078 = vst [vmem:[%s226 + $0xd8] sm:$0xff] %v1014
      %1079 = vst [vmem:[%s226 + $0xe0] sm:$0xff] %v1015
      %1080 = vst [vmem:[%s226 + $0xe8] sm:$0xff] %v1016
      %1081 = vst [vmem:[%s226 + $0xf0] sm:$0xff] %v1017
      %1082 = vst [vmem:[%s226 + $0xf8] sm:$0xff] %v1018
      %1083 = vst [vmem:[%s226 + $0x100] sm:$0xff] %v1019
      %1084 = vst [vmem:[%s226 + $0x108] sm:$0xff] %v1020
      %1085 = vst [vmem:[%s226 + $0x110] sm:$0xff] %v1021
      %1086 = vst [vmem:[%s226 + $0x118] sm:$0xff] %v1022
      %1087 = vst [vmem:[%s226 + $0x120] sm:$0xff] %v1023
      %1088 = vst [vmem:[%s226 + $0x128] sm:$0xff] %v1024
      %1089 = vst [vmem:[%s226 + $0x130] sm:$0xff] %v1025
      %1090 = vst [vmem:[%s226 + $0x138] sm:$0xff] %v1026
      %1091 = vst [vmem:[%s226 + $0x140] sm:$0xff] %v1027
      %1092 = vst [vmem:[%s226 + $0x148] sm:$0xff] %v1028
      %1093 = vst [vmem:[%s226 + $0x150] sm:$0xff] %v1029
      %1094 = vst [vmem:[%s226 + $0x158] sm:$0xff] %v1030
      %1095 = vst [vmem:[%s226 + $0x160] sm:$0xff] %v1031
      %1096 = vst [vmem:[%s226 + $0x168] sm:$0xff] %v1032
      %1097 = vst [vmem:[%s226 + $0x170] sm:$0xff] %v1033
      %1098 = vst [vmem:[%s226 + $0x178] sm:$0xff] %v1034
      %1099 = vst [vmem:[%s226 + $0x180] sm:$0xff] %v1035
      %1100 = vst [vmem:[%s226 + $0x188] sm:$0xff] %v1036
      %1101 = vst [vmem:[%s226 + $0x190] sm:$0xff] %v1037
      %1102 = vst [vmem:[%s226 + $0x198] sm:$0xff] %v1038
      %1103 = vst [vmem:[%s226 + $0x1a0] sm:$0xff] %v1039
      %1104 = vst [vmem:[%s226 + $0x1a8] sm:$0xff] %v1040
      %1105 = vst [vmem:[%s226 + $0x1b0] sm:$0xff] %v1041
      %1106 = vst [vmem:[%s226 + $0x1b8] sm:$0xff] %v1042
      %1107 = vst [vmem:[%s226 + $0x1c0] sm:$0xff] %v1043
      %1108 = vst [vmem:[%s226 + $0x1c8] sm:$0xff] %v1044
      %1109 = vst [vmem:[%s226 + $0x1d0] sm:$0xff] %v1045
      %1110 = vst [vmem:[%s226 + $0x1d8] sm:$0xff] %v1046
      %1111 = vst [vmem:[%s226 + $0x1e0] sm:$0xff] %v1047
      %1112 = vst [vmem:[%s226 + $0x1e8] sm:$0xff] %v1048
      %1113 = vst [vmem:[%s226 + $0x1f0] sm:$0xff] %v1049
      %1114 = vst [vmem:[%s226 + $0x1f8] sm:$0xff] %v1050
      %s1115 = smul.u32 64, %s16
      %p1116 = scmp.lt.s32.totalorder %s1115, 255
      %s1117 = scalar_select %p1116, %s1115, 255
      %s1118 = smul.addr %s1117, 8
      %s1119 = scalar_lea.vmem %s5, %s1118
      // Predicated region
      $region41: #{net4_forward.9} parent=39 // pred_check
        %p1120 = pneg %p144
      $region42: #{net4_forward.9} parent=39 // pred_check_branch
        %1122 = sbr.rel (%p1120) target = $region44
      $region43: #{net4_forward.9} parent=39 // pred_region
        %s1123 = smul.u32 64, %s16
      $region44: #{net4_forward.9} parent=39 // pred_fallthru
        _
    $region40: #{net4_forward.9} parent=5 // pred_fallthru
      _
    %p1124 = scmp.le.s32.totalorder 2, %s11
    // Predicated region
    $region45: #{net4_forward.9} parent=5 // pred_check
      %p1125 = pneg %p1124
    $region46: #{net4_forward.9} parent=5 // pred_check_branch
      %1127 = sbr.rel (%p1125) target = $region48
    $region47: #{net4_forward.9} parent=5 // pred_region
      %s1128 = ssub.s32 %s11, 2
      // Predicated region
      $region49: #{net4_forward.9} parent=47 // pred_check
        %p1129 = pneg %p150
      $region50: #{net4_forward.9} parent=47 // pred_check_branch
        %1131 = sbr.rel (%p1129) target = $region52
      $region51: #{net4_forward.9} parent=47 // pred_region
        %s1132 = smul.u32 64, %s17
        %p1133 = scmp.lt.s32.totalorder %s1132, 255
        %s1134 = scalar_select %p1133, %s1132, 255
        %s1135 = smul.addr %s1134, 8
        %s1136 = scalar_lea.vmem %s5, %s1135
      $region52: #{net4_forward.9} parent=47 // pred_fallthru
        _
    $region48: #{net4_forward.9} parent=5 // pred_fallthru
      _
  $region6: #{net4_forward.9} parent=0 // loop_footer
    %s15 = sadd.s32 1, %s11
  $region7: #{net4_forward.9} parent=0 // loop_footer_branch
    %10 = sbr.rel target = $region3
  $region8: #{net4_forward.9} parent=0 // loop_exit
    _

// kernel: net4_forward.11
$region0: #{net4_forward.11}
  #allocation0 [shape = 'u32[]', space=smem, size = 0x4, offset = 0x4, fixed_abs, tag = 'smem constant byte address 0x4 - core index']
  #allocation1 [shape = 'u32[144,128]{1,0:T(1,128)}', space=vmem, size = 0x12000, scoped, tag = 'internal scratch']
  %s0 = inlined_call_operand.vmem [shape: bf16[448,128], index: 0, kind: input, shape index: {}]
  %s1 = inlined_call_operand.vmem [shape: bf16[128,128], index: 1, kind: input, shape index: {}]
  %s2 = inlined_call_operand.vmem [shape: f32[1,128], index: 2, kind: input, shape index: {}]
  %s3 = inlined_call_operand.vmem [shape: f32[1,128], index: 3, kind: input, shape index: {}]
  %s4 = inlined_call_operand.vmem [shape: f32[1,128], index: 4, kind: input, shape index: {}]
  %s5 = inlined_call_operand.vmem [shape: f32[448,128], index: 5, kind: output, shape index: {}]
  %s6 = sld [smem:[#allocation0]]
  $region53: #{net4_forward.11} parent=0
    _
  %s8 = ssub.s32 1, %s6
  %s9 = scalar_select 0, %s8, %s6
  loop: start=0, step=1, limit=4
  $region2: #{net4_forward.11} parent=0 // loop_pre_header
    _
  $region3: #{net4_forward.11} parent=0 // loop_header
    %s11 = sphi 0, %s15
    %p12 = scmp.ge.s32.totalorder %s11, 4
    %s21 = sphi 0, %s23
    %s24 = sphi 0, %s21
    %s25 = sphi 0, %s24
    %s41 = sphi 0, %s25
    %s45 = sphi 0, %s45
    %s47 = sphi 0, %s45
    %s48 = sphi 0, %s47
    %s62 = sphi 0, %s48
    %s66 = sphi 0, %s66
    %s68 = sphi 0, %s66
    %s69 = sphi 0, %s68
    %s83 = sphi 0, %s69
    %s87 = sphi 0, %s87
    %s89 = sphi 0, %s87
    %s90 = sphi 0, %s89
    %s104 = sphi 0, %s90
    %s108 = sphi 0, %s108
    %s110 = sphi 0, %s108
    %s111 = sphi 0, %s110
    %s125 = sphi 0, %s111
    %s131 = sphi 0, %s133
    %s134 = sphi 0, %s131
    %s135 = sphi 0, %s134
    %s151 = sphi 0, %s135
  $region4: #{net4_forward.11} parent=0 // loop_header_branch
    %14 = sbr.rel (%p12) target = $region8
  $region5: #{net4_forward.11} parent=0 // loop_body
    %s16 = ssub.s32 %s11, 1
    %s17 = ssub.s32 %s11, 2
    %s18 = sadd.s32 %s11, 1
    %s19 = ssub.s32 %s11, %s18
    %p20 = scmp.eq.s32.totalorder %s19, 0
    %s22 = sadd.s32 %s21, 1
    %s23 = scalar_select %p20, %s21, %s22
    %p26 = pneg %p20
    %p27 = scmp.eq.s32.totalorder %s11, 1
    %p28 = por %p26, %p27
    %p29 = scmp.ne.s32.totalorder %s21, %s24
    %p30 = scmp.eq.s32.totalorder %s11, 0
    %p31 = por %p29, %p30
    %p32 = scmp.ne.s32.totalorder %s21, %s24
    %p33 = scmp.eq.s32.totalorder %s16, 1
    %p34 = por %p32, %p33
    %p35 = scmp.ne.s32.totalorder %s24, %s25
    %p36 = scmp.eq.s32.totalorder %s16, 0
    %p37 = por %p35, %p36
    %p38 = scmp.ne.s32.totalorder %s24, %s25
    %p39 = scmp.eq.s32.totalorder %s17, 1
    %p40 = por %p38, %p39
    %p42 = scmp.ne.s32.totalorder %s25, %s41
    %p43 = scmp.eq.s32.totalorder %s17, 0
    %p44 = por %p42, %p43
    %s46 = sadd.s32 %s45, 1
    %p49 = scmp.eq.s32.totalorder %s11, 1
    %p50 = scmp.ne.s32.totalorder %s45, %s47
    %p51 = scmp.eq.s32.totalorder %s11, 0
    %p52 = por %p50, %p51
    %p53 = scmp.ne.s32.totalorder %s45, %s47
    %p54 = scmp.eq.s32.totalorder %s16, 1
    %p55 = por %p53, %p54
    %p56 = scmp.ne.s32.totalorder %s47, %s48
    %p57 = scmp.eq.s32.totalorder %s16, 0
    %p58 = por %p56, %p57
    %p59 = scmp.ne.s32.totalorder %s47, %s48
    %p60 = scmp.eq.s32.totalorder %s17, 1
    %p61 = por %p59, %p60
    %p63 = scmp.ne.s32.totalorder %s48, %s62
    %p64 = scmp.eq.s32.totalorder %s17, 0
    %p65 = por %p63, %p64
    %s67 = sadd.s32 %s66, 1
    %p70 = scmp.eq.s32.totalorder %s11, 1
    %p71 = scmp.ne.s32.totalorder %s66, %s68
    %p72 = scmp.eq.s32.totalorder %s11, 0
    %p73 = por %p71, %p72
    %p74 = scmp.ne.s32.totalorder %s66, %s68
    %p75 = scmp.eq.s32.totalorder %s16, 1
    %p76 = por %p74, %p75
    %p77 = scmp.ne.s32.totalorder %s68, %s69
    %p78 = scmp.eq.s32.totalorder %s16, 0
    %p79 = por %p77, %p78
    %p80 = scmp.ne.s32.totalorder %s68, %s69
    %p81 = scmp.eq.s32.totalorder %s17, 1
    %p82 = por %p80, %p81
    %p84 = scmp.ne.s32.totalorder %s69, %s83
    %p85 = scmp.eq.s32.totalorder %s17, 0
    %p86 = por %p84, %p85
    %s88 = sadd.s32 %s87, 1
    %p91 = scmp.eq.s32.totalorder %s11, 1
    %p92 = scmp.ne.s32.totalorder %s87, %s89
    %p93 = scmp.eq.s32.totalorder %s11, 0
    %p94 = por %p92, %p93
    %p95 = scmp.ne.s32.totalorder %s87, %s89
    %p96 = scmp.eq.s32.totalorder %s16, 1
    %p97 = por %p95, %p96
    %p98 = scmp.ne.s32.totalorder %s89, %s90
    %p99 = scmp.eq.s32.totalorder %s16, 0
    %p100 = por %p98, %p99
    %p101 = scmp.ne.s32.totalorder %s89, %s90
    %p102 = scmp.eq.s32.totalorder %s17, 1
    %p103 = por %p101, %p102
    %p105 = scmp.ne.s32.totalorder %s90, %s104
    %p106 = scmp.eq.s32.totalorder %s17, 0
    %p107 = por %p105, %p106
    %s109 = sadd.s32 %s108, 1
    %p112 = scmp.eq.s32.totalorder %s11, 1
    %p113 = scmp.ne.s32.totalorder %s108, %s110
    %p114 = scmp.eq.s32.totalorder %s11, 0
    %p115 = por %p113, %p114
    %p116 = scmp.ne.s32.totalorder %s108, %s110
    %p117 = scmp.eq.s32.totalorder %s16, 1
    %p118 = por %p116, %p117
    %p119 = scmp.ne.s32.totalorder %s110, %s111
    %p120 = scmp.eq.s32.totalorder %s16, 0
    %p121 = por %p119, %p120
    %p122 = scmp.ne.s32.totalorder %s110, %s111
    %p123 = scmp.eq.s32.totalorder %s17, 1
    %p124 = por %p122, %p123
    %p126 = scmp.ne.s32.totalorder %s111, %s125
    %p127 = scmp.eq.s32.totalorder %s17, 0
    %p128 = por %p126, %p127
    %s129 = ssub.s32 %s11, %s18
    %p130 = scmp.eq.s32.totalorder %s129, 0
    %s132 = sadd.s32 %s131, 1
    %s133 = scalar_select %p130, %s131, %s132
    %p136 = pneg %p130
    %p137 = scmp.eq.s32.totalorder %s11, 1
    %p138 = por %p136, %p137
    %p139 = scmp.ne.s32.totalorder %s131, %s134
    %p140 = scmp.eq.s32.totalorder %s11, 0
    %p141 = por %p139, %p140
    %p142 = scmp.ne.s32.totalorder %s131, %s134
    %p143 = scmp.eq.s32.totalorder %s16, 1
    %p144 = por %p142, %p143
    %p145 = scmp.ne.s32.totalorder %s134, %s135
    %p146 = scmp.eq.s32.totalorder %s16, 0
    %p147 = por %p145, %p146
    %p148 = scmp.ne.s32.totalorder %s134, %s135
    %p149 = scmp.eq.s32.totalorder %s17, 1
    %p150 = por %p148, %p149
    %p152 = scmp.ne.s32.totalorder %s135, %s151
    %p153 = scmp.eq.s32.totalorder %s17, 0
    %p154 = por %p152, %p153
    %p155 = scmp.le.s32.totalorder 1, %s11
    %p156 = scmp.lt.s32.totalorder %s11, 3
    %p157 = pnand %p155, %p156
    %p158 = pneg %p157
    // Predicated region
    $region9: #{net4_forward.11} parent=5 // pred_check
      _
    $region10: #{net4_forward.11} parent=5 // pred_check_branch
      %160 = sbr.rel (%p157) target = $region12
    $region11: #{net4_forward.11} parent=5 // pred_region
      %s161 = ssub.s32 %s11, 1
      // Predicated region
      $region13: #{net4_forward.11} parent=11 // pred_check
        %p162 = pneg %p58
      $region14: #{net4_forward.11} parent=11 // pred_check_branch
        %164 = sbr.rel (%p162) target = $region16
      $region15: #{net4_forward.11} parent=11 // pred_region
        _
      $region16: #{net4_forward.11} parent=11 // pred_fallthru
        _
      // Predicated region
      $region17: #{net4_forward.11} parent=11 // pred_check
        %p165 = pneg %p79
      $region18: #{net4_forward.11} parent=11 // pred_check_branch
        %167 = sbr.rel (%p165) target = $region20
      $region19: #{net4_forward.11} parent=11 // pred_region
        _
      $region20: #{net4_forward.11} parent=11 // pred_fallthru
        _
      // Predicated region
      $region21: #{net4_forward.11} parent=11 // pred_check
        %p168 = pneg %p100
      $region22: #{net4_forward.11} parent=11 // pred_check_branch
        %170 = sbr.rel (%p168) target = $region24
      $region23: #{net4_forward.11} parent=11 // pred_region
        _
      $region24: #{net4_forward.11} parent=11 // pred_fallthru
        _
      // Predicated region
      $region25: #{net4_forward.11} parent=11 // pred_check
        %p171 = pneg %p121
      $region26: #{net4_forward.11} parent=11 // pred_check_branch
        %173 = sbr.rel (%p171) target = $region28
      $region27: #{net4_forward.11} parent=11 // pred_region
        _
      $region28: #{net4_forward.11} parent=11 // pred_fallthru
        _
    $region12: #{net4_forward.11} parent=5 // pred_fallthru
      _
    %p174 = scmp.lt.s32.totalorder %s11, 2
    // Predicated region
    $region29: #{net4_forward.11} parent=5 // pred_check
      %p175 = pneg %p174
    $region30: #{net4_forward.11} parent=5 // pred_check_branch
      %177 = sbr.rel (%p175) target = $region32
    $region31: #{net4_forward.11} parent=5 // pred_region
      // Predicated region
      $region33: #{net4_forward.11} parent=31 // pred_check
        %p178 = pneg %p31
      $region34: #{net4_forward.11} parent=31 // pred_check_branch
        %180 = sbr.rel (%p178) target = $region36
      $region35: #{net4_forward.11} parent=31 // pred_region
        %s181 = smul.u32 28, %s11
        %p182 = scmp.lt.s32.totalorder %s181, 55
        %s183 = scalar_select %p182, %s181, 55
        %s184 = smul.addr %s183, 4
        %s185 = scalar_lea.vmem %s0, %s184
        %s186 = smul.u32 28, %s11
      $region36: #{net4_forward.11} parent=31 // pred_fallthru
        _
    $region32: #{net4_forward.11} parent=5 // pred_fallthru
      _
    %p187 = scmp.le.s32.totalorder 1, %s11
    %p188 = scmp.lt.s32.totalorder %s11, 3
    %p189 = pnand %p187, %p188
    %p190 = pneg %p189
    // Predicated region
    $region37: #{net4_forward.11} parent=5 // pred_check
      _
    $region38: #{net4_forward.11} parent=5 // pred_check_branch
      %192 = sbr.rel (%p189) target = $region40
    $region39: #{net4_forward.11} parent=5 // pred_region
      %s193 = ssub.s32 %s11, 1
      %s194 = smul.u32 28, %s16
      %p195 = scmp.lt.s32.totalorder %s194, 55
      %s196 = scalar_select %p195, %s194, 55
      %s197 = smul.addr %s196, 4
      %s198 = scalar_lea.vmem %s0, %s197
      %p199 = pneg %p37
      %p200 = pneg %p34
      %p201 = pneg %p58
      %p202 = pneg %p55
      %p203 = pneg %p79
      %p204 = pneg %p76
      %p205 = pneg %p100
      %p206 = pneg %p97
      %p207 = pneg %p121
      %p208 = pneg %p118
      %p209 = pneg %p147
      %p210 = pneg %p144
      %s211 = smul.u32 28, %s16
      %p212 = scmp.lt.s32.totalorder %s211, 55
      %s213 = scalar_select %p212, %s211, 55
      %s214 = smul.addr %s213, 8
      %s215 = scalar_lea.vmem %s5, %s214
      %s216 = smul.u32 28, %s16
      %p217 = scmp.lt.s32.totalorder %s216, 55
      %s218 = scalar_select %p217, %s216, 55
      %s219 = smul.addr %s218, 4
      %s220 = scalar_lea.vmem %s0, %s219
      %s221 = smul.u32 28, %s16
      %s222 = smul.u32 28, %s16
      %p223 = scmp.lt.s32.totalorder %s222, 55
      %s224 = scalar_select %p223, %s222, 55
      %s225 = smul.addr %s224, 8
      %s226 = scalar_lea.vmem %s5, %s225
      %s227 = smul.u32 28, %s16
      %v229 = vld [vmem:[%s220] sm:$0xf]
      %v230 = vld [vmem:[%s220 + $0x4] sm:$0xf]
      %v231 = vld [vmem:[%s220 + $0x8] sm:$0xf]
      %v232 = vld [vmem:[%s220 + $0xc] sm:$0xf]
      %v233 = vld [vmem:[%s220 + $0x10] sm:$0xf]
      %v234 = vld [vmem:[%s220 + $0x14] sm:$0xf]
      %v235 = vld [vmem:[%s220 + $0x18] sm:$0xf]
      %v236 = vld [vmem:[%s220 + $0x1c] sm:$0xf]
      %v237 = vld [vmem:[%s220 + $0x20] sm:$0xf]
      %v238 = vld [vmem:[%s220 + $0x24] sm:$0xf]
      %v239 = vld [vmem:[%s220 + $0x28] sm:$0xf]
      %v240 = vld [vmem:[%s220 + $0x2c] sm:$0xf]
      %v241 = vld [vmem:[%s220 + $0x30] sm:$0xf]
      %v242 = vld [vmem:[%s220 + $0x34] sm:$0xf]
      %v243 = vld [vmem:[%s220 + $0x38] sm:$0xf]
      %v244 = vld [vmem:[%s220 + $0x3c] sm:$0xf]
      %v245 = vld [vmem:[%s220 + $0x40] sm:$0xf]
      %v246 = vld [vmem:[%s220 + $0x44] sm:$0xf]
      %v247 = vld [vmem:[%s220 + $0x48] sm:$0xf]
      %v248 = vld [vmem:[%s220 + $0x4c] sm:$0xf]
      %v249 = vld [vmem:[%s220 + $0x50] sm:$0xf]
      %v250 = vld [vmem:[%s220 + $0x54] sm:$0xf]
      %v251 = vld [vmem:[%s220 + $0x58] sm:$0xf]
      %v252 = vld [vmem:[%s220 + $0x5c] sm:$0xf]
      %v253 = vld [vmem:[%s220 + $0x60] sm:$0xf]
      %v254 = vld [vmem:[%s220 + $0x64] sm:$0xf]
      %v255 = vld [vmem:[%s220 + $0x68] sm:$0xf]
      %v256 = vld [vmem:[%s220 + $0x6c] sm:$0xf]
      %v257 = vld [vmem:[%s1] sm:$0xf]
      %v258 = vld [vmem:[%s1 + $0x4] sm:$0xf]
      %v259 = vld [vmem:[%s1 + $0x8] sm:$0xf]
      %v260 = vld [vmem:[%s1 + $0xc] sm:$0xf]
      %v261 = vld [vmem:[%s1 + $0x10] sm:$0xf]
      %v262 = vld [vmem:[%s1 + $0x14] sm:$0xf]
      %v263 = vld [vmem:[%s1 + $0x18] sm:$0xf]
      %v264 = vld [vmem:[%s1 + $0x1c] sm:$0xf]
      %v265 = vld [vmem:[%s1 + $0x20] sm:$0xf]
      %v266 = vld [vmem:[%s1 + $0x24] sm:$0xf]
      %v267 = vld [vmem:[%s1 + $0x28] sm:$0xf]
      %v268 = vld [vmem:[%s1 + $0x2c] sm:$0xf]
      %v269 = vld [vmem:[%s1 + $0x30] sm:$0xf]
      %v270 = vld [vmem:[%s1 + $0x34] sm:$0xf]
      %v271 = vld [vmem:[%s1 + $0x38] sm:$0xf]
      %v272 = vld [vmem:[%s1 + $0x3c] sm:$0xf]
      %v273 = vld [vmem:[%s2] sm:$0x1]
      %v275 = vlaneseq
      %v276 = vshrl.u32 %v275, 7
      %v277 = vsub.s32 0, %v276
      %v278 = vrot.slane %v273, %v277
      %v308 = vunpack.c.l.b16 %v229
      %v309 = vunpack.c.l.b16 %v230
      %v310 = vunpack.c.l.b16 %v231
      %v311 = vunpack.c.l.b16 %v232
      %v312 = vunpack.c.l.b16 %v233
      %v313 = vunpack.c.l.b16 %v234
      %v314 = vunpack.c.l.b16 %v235
      %v315 = vunpack.c.l.b16 %v236
      %v316 = vunpack.c.l.b16 %v237
      %v317 = vunpack.c.l.b16 %v238
      %v318 = vunpack.c.l.b16 %v239
      %v319 = vunpack.c.l.b16 %v240
      %v320 = vunpack.c.l.b16 %v241
      %v321 = vunpack.c.l.b16 %v242
      %v322 = vunpack.c.l.b16 %v243
      %v323 = vunpack.c.l.b16 %v244
      %v324 = vunpack.c.l.b16 %v245
      %v325 = vunpack.c.l.b16 %v246
      %v326 = vunpack.c.l.b16 %v247
      %v327 = vunpack.c.l.b16 %v248
      %v328 = vunpack.c.l.b16 %v249
      %v329 = vunpack.c.l.b16 %v250
      %v330 = vunpack.c.l.b16 %v251
      %v331 = vunpack.c.l.b16 %v252
      %v332 = vunpack.c.l.b16 %v253
      %v333 = vunpack.c.l.b16 %v254
      %v334 = vunpack.c.l.b16 %v255
      %v335 = vunpack.c.l.b16 %v256
      %v336 = vpack.c.b16 %v309, %v308
      %v337 = vpack.c.b16 %v311, %v310
      %v338 = vpack.c.b16 %v313, %v312
      %v339 = vpack.c.b16 %v315, %v314
      %v340 = vpack.c.b16 %v317, %v316
      %v341 = vpack.c.b16 %v319, %v318
      %v342 = vpack.c.b16 %v321, %v320
      %v343 = vpack.c.b16 %v323, %v322
      %v344 = vpack.c.b16 %v325, %v324
      %v345 = vpack.c.b16 %v327, %v326
      %v346 = vpack.c.b16 %v329, %v328
      %v347 = vpack.c.b16 %v331, %v330
      %v348 = vpack.c.b16 %v333, %v332
      %v349 = vpack.c.b16 %v335, %v334
      %v380 = vunpack.c.l.b16 %v257
      %v381 = vunpack.c.l.b16 %v258
      %v382 = vunpack.c.l.b16 %v259
      %v383 = vunpack.c.l.b16 %v260
      %v384 = vunpack.c.l.b16 %v261
      %v385 = vunpack.c.l.b16 %v262
      %v386 = vunpack.c.l.b16 %v263
      %v387 = vunpack.c.l.b16 %v264
      %v388 = vunpack.c.l.b16 %v265
      %v389 = vunpack.c.l.b16 %v266
      %v390 = vunpack.c.l.b16 %v267
      %v391 = vunpack.c.l.b16 %v268
      %v392 = vunpack.c.l.b16 %v269
      %v393 = vunpack.c.l.b16 %v270
      %v394 = vunpack.c.l.b16 %v271
      %v395 = vunpack.c.l.b16 %v272
      %v396 = vpack.c.b16 %v381, %v380
      %v397 = vpack.c.b16 %v383, %v382
      %v398 = vpack.c.b16 %v385, %v384
      %v399 = vpack.c.b16 %v387, %v386
      %v400 = vpack.c.b16 %v389, %v388
      %v401 = vpack.c.b16 %v391, %v390
      %v402 = vpack.c.b16 %v393, %v392
      %v403 = vpack.c.b16 %v395, %v394
      %412 = vmatprep.subr.bf16.mxu0 0
      %413 = vmatpush1.bf16.msra.mxu0 %v396
      %414 = vmatprep.subr.bf16.mxu0 0
      %415 = vmatpush1.bf16.msra.mxu0 %v397
      %416 = vmatprep.subr.bf16.mxu0 0
      %417 = vmatpush1.bf16.msra.mxu0 %v398
      %418 = vmatprep.subr.bf16.mxu0 0
      %419 = vmatpush1.bf16.msra.mxu0 %v399
      %420 = vmatprep.subr.bf16.mxu0 0
      %421 = vmatpush1.bf16.msra.mxu0 %v400
      %422 = vmatprep.subr.bf16.mxu0 0
      %423 = vmatpush1.bf16.msra.mxu0 %v401
      %424 = vmatprep.subr.bf16.mxu0 0
      %425 = vmatpush1.bf16.msra.mxu0 %v402
      %426 = vmatprep.subr.bf16.mxu0 0
      %427 = vmatpush1.bf16.msra.mxu0 %v403
      %428 = vmatprep.subr.bf16.mxu0 0
      %429 = vmatpush1.bf16.msra.mxu0 0
      %430 = vmatprep.subr.bf16.mxu0 0
      %431 = vmatpush1.bf16.msra.mxu0 0
      %432 = vmatprep.subr.bf16.mxu0 0
      %433 = vmatpush1.bf16.msra.mxu0 0
      %434 = vmatprep.subr.bf16.mxu0 0
      %435 = vmatpush1.bf16.msra.mxu0 0
      %436 = vmatprep.subr.bf16.mxu0 0
      %437 = vmatpush1.bf16.msra.mxu0 0
      %438 = vmatprep.subr.bf16.mxu0 0
      %439 = vmatpush1.bf16.msra.mxu0 0
      %440 = vmatprep.subr.bf16.mxu0 0
      %441 = vmatpush1.bf16.msra.mxu0 0
      %442 = vmatprep.subr.bf16.mxu0 0
      %443 = vmatpush1.bf16.msra.mxu0 0
      %444 = vmatprep.mubr.bf16.mxu0 0
      %445 = vmatmul.mubr.bf16.gmra.mrb[0].mxu0 %v336
      %v446 = vpop.f32.mrb[0].mxu0
      %v447 = vadd.f32 %v278, %v446
      %v448 = vpop.f32.mrb[0].mxu0
      %v449 = vpop.f32.mrb[0].mxu0
      %v450 = vadd.f32 %v278, %v449
      %v451 = vpop.f32.mrb[0].mxu0
      %452 = vmatprep.mubr.bf16.mxu0 0
      %453 = vmatmul.mubr.bf16.gmra.mrb[0].mxu0 %v337
      %v454 = vpop.f32.mrb[0].mxu0
      %v455 = vadd.f32 %v278, %v454
      %v456 = vpop.f32.mrb[0].mxu0
      %v457 = vpop.f32.mrb[0].mxu0
      %v458 = vadd.f32 %v278, %v457
      %v459 = vpop.f32.mrb[0].mxu0
      %460 = vmatprep.mubr.bf16.mxu0 0
      %461 = vmatmul.mubr.bf16.gmra.mrb[0].mxu0 %v338
      %v462 = vpop.f32.mrb[0].mxu0
      %v463 = vadd.f32 %v278, %v462
      %v464 = vpop.f32.mrb[0].mxu0
      %v465 = vpop.f32.mrb[0].mxu0
      %v466 = vadd.f32 %v278, %v465
      %v467 = vpop.f32.mrb[0].mxu0
      %468 = vmatprep.mubr.bf16.mxu0 0
      %469 = vmatmul.mubr.bf16.gmra.mrb[0].mxu0 %v339
      %v470 = vpop.f32.mrb[0].mxu0
      %v471 = vadd.f32 %v278, %v470
      %v472 = vpop.f32.mrb[0].mxu0
      %v473 = vpop.f32.mrb[0].mxu0
      %v474 = vadd.f32 %v278, %v473
      %v475 = vpop.f32.mrb[0].mxu0
      %476 = vmatprep.mubr.bf16.mxu0 0
      %477 = vmatmul.mubr.bf16.gmra.mrb[0].mxu0 %v340
      %v478 = vpop.f32.mrb[0].mxu0
      %v479 = vadd.f32 %v278, %v478
      %v480 = vpop.f32.mrb[0].mxu0
      %v481 = vpop.f32.mrb[0].mxu0
      %v482 = vadd.f32 %v278, %v481
      %v483 = vpop.f32.mrb[0].mxu0
      %484 = vmatprep.mubr.bf16.mxu0 0
      %485 = vmatmul.mubr.bf16.gmra.mrb[0].mxu0 %v341
      %v486 = vpop.f32.mrb[0].mxu0
      %v487 = vadd.f32 %v278, %v486
      %v488 = vpop.f32.mrb[0].mxu0
      %v489 = vpop.f32.mrb[0].mxu0
      %v490 = vadd.f32 %v278, %v489
      %v491 = vpop.f32.mrb[0].mxu0
      %492 = vmatprep.mubr.bf16.mxu0 0
      %493 = vmatmul.mubr.bf16.gmra.mrb[0].mxu0 %v342
      %v494 = vpop.f32.mrb[0].mxu0
      %v495 = vadd.f32 %v278, %v494
      %v496 = vpop.f32.mrb[0].mxu0
      %v497 = vpop.f32.mrb[0].mxu0
      %v498 = vadd.f32 %v278, %v497
      %v499 = vpop.f32.mrb[0].mxu0
      %500 = vmatprep.mubr.bf16.mxu0 0
      %501 = vmatmul.mubr.bf16.gmra.mrb[0].mxu0 %v343
      %v502 = vpop.f32.mrb[0].mxu0
      %v503 = vadd.f32 %v278, %v502
      %v504 = vpop.f32.mrb[0].mxu0
      %v505 = vpop.f32.mrb[0].mxu0
      %v506 = vadd.f32 %v278, %v505
      %v507 = vpop.f32.mrb[0].mxu0
      %508 = vmatprep.mubr.bf16.mxu0 0
      %509 = vmatmul.mubr.bf16.gmra.mrb[0].mxu0 %v344
      %v510 = vpop.f32.mrb[0].mxu0
      %v511 = vadd.f32 %v278, %v510
      %v512 = vpop.f32.mrb[0].mxu0
      %v513 = vpop.f32.mrb[0].mxu0
      %v514 = vadd.f32 %v278, %v513
      %v515 = vpop.f32.mrb[0].mxu0
      %516 = vmatprep.mubr.bf16.mxu0 0
      %517 = vmatmul.mubr.bf16.gmra.mrb[0].mxu0 %v345
      %v518 = vpop.f32.mrb[0].mxu0
      %v519 = vadd.f32 %v278, %v518
      %v520 = vpop.f32.mrb[0].mxu0
      %v521 = vpop.f32.mrb[0].mxu0
      %v522 = vadd.f32 %v278, %v521
      %v523 = vpop.f32.mrb[0].mxu0
      %524 = vmatprep.mubr.bf16.mxu0 0
      %525 = vmatmul.mubr.bf16.gmra.mrb[0].mxu0 %v346
      %v526 = vpop.f32.mrb[0].mxu0
      %v527 = vadd.f32 %v278, %v526
      %v528 = vpop.f32.mrb[0].mxu0
      %v529 = vpop.f32.mrb[0].mxu0
      %v530 = vadd.f32 %v278, %v529
      %v531 = vpop.f32.mrb[0].mxu0
      %532 = vmatprep.mubr.bf16.mxu0 0
      %533 = vmatmul.mubr.bf16.gmra.mrb[0].mxu0 %v347
      %v534 = vpop.f32.mrb[0].mxu0
      %v535 = vadd.f32 %v278, %v534
      %v536 = vpop.f32.mrb[0].mxu0
      %v537 = vpop.f32.mrb[0].mxu0
      %v538 = vadd.f32 %v278, %v537
      %v539 = vpop.f32.mrb[0].mxu0
      %540 = vmatprep.mubr.bf16.mxu0 0
      %541 = vmatmul.mubr.bf16.gmra.mrb[0].mxu0 %v348
      %v542 = vpop.f32.mrb[0].mxu0
      %v543 = vadd.f32 %v278, %v542
      %v544 = vpop.f32.mrb[0].mxu0
      %v545 = vpop.f32.mrb[0].mxu0
      %v546 = vadd.f32 %v278, %v545
      %v547 = vpop.f32.mrb[0].mxu0
      %548 = vmatprep.mubr.bf16.mxu0 0
      %549 = vmatmul.mubr.bf16.gmra.mrb[0].mxu0 %v349
      %v550 = vpop.f32.mrb[0].mxu0
      %v551 = vadd.f32 %v278, %v550
      %v552 = vpop.f32.mrb[0].mxu0
      %v553 = vpop.f32.mrb[0].mxu0
      %v554 = vadd.f32 %v278, %v553
      %v555 = vpop.f32.mrb[0].mxu0
      %556 = vdwg.mxu0
      %v557 = vmax.f32 %v447, 0.0
      %v558 = vmax.f32 %v450, 0.0
      %v559 = vmax.f32 %v455, 0.0
      %v560 = vmax.f32 %v458, 0.0
      %v561 = vmax.f32 %v463, 0.0
      %v562 = vmax.f32 %v466, 0.0
      %v563 = vmax.f32 %v471, 0.0
      %v564 = vmax.f32 %v474, 0.0
      %v565 = vmax.f32 %v479, 0.0
      %v566 = vmax.f32 %v482, 0.0
      %v567 = vmax.f32 %v487, 0.0
      %v568 = vmax.f32 %v490, 0.0
      %v569 = vmax.f32 %v495, 0.0
      %v570 = vmax.f32 %v498, 0.0
      %v571 = vmax.f32 %v503, 0.0
      %v572 = vmax.f32 %v506, 0.0
      %v573 = vmax.f32 %v511, 0.0
      %v574 = vmax.f32 %v514, 0.0
      %v575 = vmax.f32 %v519, 0.0
      %v576 = vmax.f32 %v522, 0.0
      %v577 = vmax.f32 %v527, 0.0
      %v578 = vmax.f32 %v530, 0.0
      %v579 = vmax.f32 %v535, 0.0
      %v580 = vmax.f32 %v538, 0.0
      %v581 = vmax.f32 %v543, 0.0
      %v582 = vmax.f32 %v546, 0.0
      %v583 = vmax.f32 %v551, 0.0
      %v584 = vmax.f32 %v554, 0.0
      %v585 = vld [vmem:[%s3] sm:$0x1]
      %v587 = vlaneseq
      %v588 = vshrl.u32 %v587, 7
      %v589 = vsub.s32 0, %v588
      %v590 = vrot.slane %v585, %v589
      %v592 = vmul.f32 %v557, %v590
      %v593 = vmul.f32 %v558, %v590
      %v594 = vmul.f32 %v559, %v590
      %v595 = vmul.f32 %v560, %v590
      %v596 = vmul.f32 %v561, %v590
      %v597 = vmul.f32 %v562, %v590
      %v598 = vmul.f32 %v563, %v590
      %v599 = vmul.f32 %v564, %v590
      %v600 = vmul.f32 %v565, %v590
      %v601 = vmul.f32 %v566, %v590
      %v602 = vmul.f32 %v567, %v590
      %v603 = vmul.f32 %v568, %v590
      %v604 = vmul.f32 %v569, %v590
      %v605 = vmul.f32 %v570, %v590
      %v606 = vmul.f32 %v571, %v590
      %v607 = vmul.f32 %v572, %v590
      %v608 = vmul.f32 %v573, %v590
      %v609 = vmul.f32 %v574, %v590
      %v610 = vmul.f32 %v575, %v590
      %v611 = vmul.f32 %v576, %v590
      %v612 = vmul.f32 %v577, %v590
      %v613 = vmul.f32 %v578, %v590
      %v614 = vmul.f32 %v579, %v590
      %v615 = vmul.f32 %v580, %v590
      %v616 = vmul.f32 %v581, %v590
      %v617 = vmul.f32 %v582, %v590
      %v618 = vmul.f32 %v583, %v590
      %v619 = vmul.f32 %v584, %v590
      %v620 = vld [vmem:[%s4] sm:$0x1]
      %v622 = vlaneseq
      %v623 = vshrl.u32 %v622, 7
      %v624 = vsub.s32 0, %v623
      %v625 = vrot.slane %v620, %v624
      %v627 = vadd.f32 %v592, %v625
      %v628 = vadd.f32 %v593, %v625
      %v629 = vadd.f32 %v594, %v625
      %v630 = vadd.f32 %v595, %v625
      %v631 = vadd.f32 %v596, %v625
      %v632 = vadd.f32 %v597, %v625
      %v633 = vadd.f32 %v598, %v625
      %v634 = vadd.f32 %v599, %v625
      %v635 = vadd.f32 %v600, %v625
      %v636 = vadd.f32 %v601, %v625
      %v637 = vadd.f32 %v602, %v625
      %v638 = vadd.f32 %v603, %v625
      %v639 = vadd.f32 %v604, %v625
      %v640 = vadd.f32 %v605, %v625
      %v641 = vadd.f32 %v606, %v625
      %v642 = vadd.f32 %v607, %v625
      %v643 = vadd.f32 %v608, %v625
      %v644 = vadd.f32 %v609, %v625
      %v645 = vadd.f32 %v610, %v625
      %v646 = vadd.f32 %v611, %v625
      %v647 = vadd.f32 %v612, %v625
      %v648 = vadd.f32 %v613, %v625
      %v649 = vadd.f32 %v614, %v625
      %v650 = vadd.f32 %v615, %v625
      %v651 = vadd.f32 %v616, %v625
      %v652 = vadd.f32 %v617, %v625
      %v653 = vadd.f32 %v618, %v625
      %v654 = vadd.f32 %v619, %v625
      %655 = vst [vmem:[%s226] sm:$0xff] %v627
      %656 = vst [vmem:[%s226 + $0x8] sm:$0xff] %v628
      %657 = vst [vmem:[%s226 + $0x10] sm:$0xff] %v629
      %658 = vst [vmem:[%s226 + $0x18] sm:$0xff] %v630
      %659 = vst [vmem:[%s226 + $0x20] sm:$0xff] %v631
      %660 = vst [vmem:[%s226 + $0x28] sm:$0xff] %v632
      %661 = vst [vmem:[%s226 + $0x30] sm:$0xff] %v633
      %662 = vst [vmem:[%s226 + $0x38] sm:$0xff] %v634
      %663 = vst [vmem:[%s226 + $0x40] sm:$0xff] %v635
      %664 = vst [vmem:[%s226 + $0x48] sm:$0xff] %v636
      %665 = vst [vmem:[%s226 + $0x50] sm:$0xff] %v637
      %666 = vst [vmem:[%s226 + $0x58] sm:$0xff] %v638
      %667 = vst [vmem:[%s226 + $0x60] sm:$0xff] %v639
      %668 = vst [vmem:[%s226 + $0x68] sm:$0xff] %v640
      %669 = vst [vmem:[%s226 + $0x70] sm:$0xff] %v641
      %670 = vst [vmem:[%s226 + $0x78] sm:$0xff] %v642
      %671 = vst [vmem:[%s226 + $0x80] sm:$0xff] %v643
      %672 = vst [vmem:[%s226 + $0x88] sm:$0xff] %v644
      %673 = vst [vmem:[%s226 + $0x90] sm:$0xff] %v645
      %674 = vst [vmem:[%s226 + $0x98] sm:$0xff] %v646
      %675 = vst [vmem:[%s226 + $0xa0] sm:$0xff] %v647
      %676 = vst [vmem:[%s226 + $0xa8] sm:$0xff] %v648
      %677 = vst [vmem:[%s226 + $0xb0] sm:$0xff] %v649
      %678 = vst [vmem:[%s226 + $0xb8] sm:$0xff] %v650
      %679 = vst [vmem:[%s226 + $0xc0] sm:$0xff] %v651
      %680 = vst [vmem:[%s226 + $0xc8] sm:$0xff] %v652
      %681 = vst [vmem:[%s226 + $0xd0] sm:$0xff] %v653
      %682 = vst [vmem:[%s226 + $0xd8] sm:$0xff] %v654
      %s683 = smul.u32 28, %s16
      %p684 = scmp.lt.s32.totalorder %s683, 55
      %s685 = scalar_select %p684, %s683, 55
      %s686 = smul.addr %s685, 8
      %s687 = scalar_lea.vmem %s5, %s686
      // Predicated region
      $region41: #{net4_forward.11} parent=39 // pred_check
        %p688 = pneg %p144
      $region42: #{net4_forward.11} parent=39 // pred_check_branch
        %690 = sbr.rel (%p688) target = $region44
      $region43: #{net4_forward.11} parent=39 // pred_region
        %s691 = smul.u32 28, %s16
      $region44: #{net4_forward.11} parent=39 // pred_fallthru
        _
    $region40: #{net4_forward.11} parent=5 // pred_fallthru
      _
    %p692 = scmp.le.s32.totalorder 2, %s11
    // Predicated region
    $region45: #{net4_forward.11} parent=5 // pred_check
      %p693 = pneg %p692
    $region46: #{net4_forward.11} parent=5 // pred_check_branch
      %695 = sbr.rel (%p693) target = $region48
    $region47: #{net4_forward.11} parent=5 // pred_region
      %s696 = ssub.s32 %s11, 2
      // Predicated region
      $region49: #{net4_forward.11} parent=47 // pred_check
        %p697 = pneg %p150
      $region50: #{net4_forward.11} parent=47 // pred_check_branch
        %699 = sbr.rel (%p697) target = $region52
      $region51: #{net4_forward.11} parent=47 // pred_region
        %s700 = smul.u32 28, %s17
        %p701 = scmp.lt.s32.totalorder %s700, 55
        %s702 = scalar_select %p701, %s700, 55
        %s703 = smul.addr %s702, 8
        %s704 = scalar_lea.vmem %s5, %s703
      $region52: #{net4_forward.11} parent=47 // pred_fallthru
        _
    $region48: #{net4_forward.11} parent=5 // pred_fallthru
      _
  $region6: #{net4_forward.11} parent=0 // loop_footer
    %s15 = sadd.s32 1, %s11
  $region7: #{net4_forward.11} parent=0 // loop_footer_branch
    %10 = sbr.rel target = $region3
  $region8: #{net4_forward.11} parent=0 // loop_exit
    _

// kernel: net4_forward.13
$region0: #{net4_forward.13}
  #allocation0 [shape = 'u32[]', space=smem, size = 0x4, offset = 0x4, fixed_abs, tag = 'smem constant byte address 0x4 - core index']
  #allocation1 [shape = 'u32[144,128]{1,0:T(1,128)}', space=vmem, size = 0x12000, scoped, tag = 'internal scratch']
  %s0 = inlined_call_operand.vmem [shape: bf16[128,128], index: 0, kind: input, shape index: {}]
  %s1 = inlined_call_operand.vmem [shape: bf16[128,128], index: 1, kind: input, shape index: {}]
  %s2 = inlined_call_operand.vmem [shape: f32[1,128], index: 2, kind: input, shape index: {}]
  %s3 = inlined_call_operand.vmem [shape: f32[1,128], index: 3, kind: input, shape index: {}]
  %s4 = inlined_call_operand.vmem [shape: f32[1,128], index: 4, kind: input, shape index: {}]
  %s5 = inlined_call_operand.vmem [shape: f32[128,128], index: 5, kind: output, shape index: {}]
  %s6 = sld [smem:[#allocation0]]
  $region30: #{net4_forward.13} parent=0
    _
  %s8 = ssub.s32 1, %s6
  %s9 = scalar_select 0, %s8, %s6
  // Predicated region
  $region2: #{net4_forward.13} parent=0 // pred_check
    _
  $region3: #{net4_forward.13} parent=0 // pred_check_branch
    %11 = sbr.rel (0) target = $region5
  $region4: #{net4_forward.13} parent=0 // pred_region
    _
  $region5: #{net4_forward.13} parent=0 // pred_fallthru
    _
  // Predicated region
  $region6: #{net4_forward.13} parent=0 // pred_check
    _
  $region7: #{net4_forward.13} parent=0 // pred_check_branch
    %13 = sbr.rel (0) target = $region9
  $region8: #{net4_forward.13} parent=0 // pred_region
    _
  $region9: #{net4_forward.13} parent=0 // pred_fallthru
    _
  // Predicated region
  $region10: #{net4_forward.13} parent=0 // pred_check
    _
  $region11: #{net4_forward.13} parent=0 // pred_check_branch
    %15 = sbr.rel (0) target = $region13
  $region12: #{net4_forward.13} parent=0 // pred_region
    _
  $region13: #{net4_forward.13} parent=0 // pred_fallthru
    _
  // Predicated region
  $region14: #{net4_forward.13} parent=0 // pred_check
    _
  $region15: #{net4_forward.13} parent=0 // pred_check_branch
    %17 = sbr.rel (0) target = $region17
  $region16: #{net4_forward.13} parent=0 // pred_region
    _
  $region17: #{net4_forward.13} parent=0 // pred_fallthru
    _
  // Predicated region
  $region18: #{net4_forward.13} parent=0 // pred_check
    _
  $region19: #{net4_forward.13} parent=0 // pred_check_branch
    %19 = sbr.rel (0) target = $region21
  $region20: #{net4_forward.13} parent=0 // pred_region
    _
  $region21: #{net4_forward.13} parent=0 // pred_fallthru
    _
  %v21 = vld [vmem:[%s0] sm:$0xf]
  %v22 = vld [vmem:[%s0 + $0x4] sm:$0xf]
  %v23 = vld [vmem:[%s0 + $0x8] sm:$0xf]
  %v24 = vld [vmem:[%s0 + $0xc] sm:$0xf]
  %v25 = vld [vmem:[%s0 + $0x10] sm:$0xf]
  %v26 = vld [vmem:[%s0 + $0x14] sm:$0xf]
  %v27 = vld [vmem:[%s0 + $0x18] sm:$0xf]
  %v28 = vld [vmem:[%s0 + $0x1c] sm:$0xf]
  %v29 = vld [vmem:[%s0 + $0x20] sm:$0xf]
  %v30 = vld [vmem:[%s0 + $0x24] sm:$0xf]
  %v31 = vld [vmem:[%s0 + $0x28] sm:$0xf]
  %v32 = vld [vmem:[%s0 + $0x2c] sm:$0xf]
  %v33 = vld [vmem:[%s0 + $0x30] sm:$0xf]
  %v34 = vld [vmem:[%s0 + $0x34] sm:$0xf]
  %v35 = vld [vmem:[%s0 + $0x38] sm:$0xf]
  %v36 = vld [vmem:[%s0 + $0x3c] sm:$0xf]
  %v37 = vld [vmem:[%s1] sm:$0xf]
  %v38 = vld [vmem:[%s1 + $0x4] sm:$0xf]
  %v39 = vld [vmem:[%s1 + $0x8] sm:$0xf]
  %v40 = vld [vmem:[%s1 + $0xc] sm:$0xf]
  %v41 = vld [vmem:[%s1 + $0x10] sm:$0xf]
  %v42 = vld [vmem:[%s1 + $0x14] sm:$0xf]
  %v43 = vld [vmem:[%s1 + $0x18] sm:$0xf]
  %v44 = vld [vmem:[%s1 + $0x1c] sm:$0xf]
  %v45 = vld [vmem:[%s1 + $0x20] sm:$0xf]
  %v46 = vld [vmem:[%s1 + $0x24] sm:$0xf]
  %v47 = vld [vmem:[%s1 + $0x28] sm:$0xf]
  %v48 = vld [vmem:[%s1 + $0x2c] sm:$0xf]
  %v49 = vld [vmem:[%s1 + $0x30] sm:$0xf]
  %v50 = vld [vmem:[%s1 + $0x34] sm:$0xf]
  %v51 = vld [vmem:[%s1 + $0x38] sm:$0xf]
  %v52 = vld [vmem:[%s1 + $0x3c] sm:$0xf]
  %v53 = vld [vmem:[%s2] sm:$0x1]
  %v55 = vlaneseq
  %v56 = vshrl.u32 %v55, 7
  %v57 = vsub.s32 0, %v56
  %v58 = vrot.slane %v53, %v57
  %v76 = vunpack.c.l.b16 %v21
  %v77 = vunpack.c.l.b16 %v22
  %v78 = vunpack.c.l.b16 %v23
  %v79 = vunpack.c.l.b16 %v24
  %v80 = vunpack.c.l.b16 %v25
  %v81 = vunpack.c.l.b16 %v26
  %v82 = vunpack.c.l.b16 %v27
  %v83 = vunpack.c.l.b16 %v28
  %v84 = vunpack.c.l.b16 %v29
  %v85 = vunpack.c.l.b16 %v30
  %v86 = vunpack.c.l.b16 %v31
  %v87 = vunpack.c.l.b16 %v32
  %v88 = vunpack.c.l.b16 %v33
  %v89 = vunpack.c.l.b16 %v34
  %v90 = vunpack.c.l.b16 %v35
  %v91 = vunpack.c.l.b16 %v36
  %v92 = vpack.c.b16 %v77, %v76
  %v93 = vpack.c.b16 %v79, %v78
  %v94 = vpack.c.b16 %v81, %v80
  %v95 = vpack.c.b16 %v83, %v82
  %v96 = vpack.c.b16 %v85, %v84
  %v97 = vpack.c.b16 %v87, %v86
  %v98 = vpack.c.b16 %v89, %v88
  %v99 = vpack.c.b16 %v91, %v90
  %v124 = vunpack.c.l.b16 %v37
  %v125 = vunpack.c.l.b16 %v38
  %v126 = vunpack.c.l.b16 %v39
  %v127 = vunpack.c.l.b16 %v40
  %v128 = vunpack.c.l.b16 %v41
  %v129 = vunpack.c.l.b16 %v42
  %v130 = vunpack.c.l.b16 %v43
  %v131 = vunpack.c.l.b16 %v44
  %v132 = vunpack.c.l.b16 %v45
  %v133 = vunpack.c.l.b16 %v46
  %v134 = vunpack.c.l.b16 %v47
  %v135 = vunpack.c.l.b16 %v48
  %v136 = vunpack.c.l.b16 %v49
  %v137 = vunpack.c.l.b16 %v50
  %v138 = vunpack.c.l.b16 %v51
  %v139 = vunpack.c.l.b16 %v52
  %v140 = vpack.c.b16 %v125, %v124
  %v141 = vpack.c.b16 %v127, %v126
  %v142 = vpack.c.b16 %v129, %v128
  %v143 = vpack.c.b16 %v131, %v130
  %v144 = vpack.c.b16 %v133, %v132
  %v145 = vpack.c.b16 %v135, %v134
  %v146 = vpack.c.b16 %v137, %v136
  %v147 = vpack.c.b16 %v139, %v138
  %156 = vmatprep.subr.bf16.mxu0 0
  %157 = vmatpush1.bf16.msra.mxu0 %v140
  %158 = vmatprep.subr.bf16.mxu0 0
  %159 = vmatpush1.bf16.msra.mxu0 %v141
  %160 = vmatprep.subr.bf16.mxu0 0
  %161 = vmatpush1.bf16.msra.mxu0 %v142
  %162 = vmatprep.subr.bf16.mxu0 0
  %163 = vmatpush1.bf16.msra.mxu0 %v143
  %164 = vmatprep.subr.bf16.mxu0 0
  %165 = vmatpush1.bf16.msra.mxu0 %v144
  %166 = vmatprep.subr.bf16.mxu0 0
  %167 = vmatpush1.bf16.msra.mxu0 %v145
  %168 = vmatprep.subr.bf16.mxu0 0
  %169 = vmatpush1.bf16.msra.mxu0 %v146
  %170 = vmatprep.subr.bf16.mxu0 0
  %171 = vmatpush1.bf16.msra.mxu0 %v147
  %172 = vmatprep.subr.bf16.mxu0 0
  %173 = vmatpush1.bf16.msra.mxu0 0
  %174 = vmatprep.subr.bf16.mxu0 0
  %175 = vmatpush1.bf16.msra.mxu0 0
  %176 = vmatprep.subr.bf16.mxu0 0
  %177 = vmatpush1.bf16.msra.mxu0 0
  %178 = vmatprep.subr.bf16.mxu0 0
  %179 = vmatpush1.bf16.msra.mxu0 0
  %180 = vmatprep.subr.bf16.mxu0 0
  %181 = vmatpush1.bf16.msra.mxu0 0
  %182 = vmatprep.subr.bf16.mxu0 0
  %183 = vmatpush1.bf16.msra.mxu0 0
  %184 = vmatprep.subr.bf16.mxu0 0
  %185 = vmatpush1.bf16.msra.mxu0 0
  %186 = vmatprep.subr.bf16.mxu0 0
  %187 = vmatpush1.bf16.msra.mxu0 0
  %188 = vmatprep.mubr.bf16.mxu0 0
  %189 = vmatmul.mubr.bf16.gmra.mrb[0].mxu0 %v92
  %v190 = vpop.f32.mrb[0].mxu0
  %v191 = vadd.f32 %v58, %v190
  %v192 = vpop.f32.mrb[0].mxu0
  %v193 = vpop.f32.mrb[0].mxu0
  %v194 = vadd.f32 %v58, %v193
  %v195 = vpop.f32.mrb[0].mxu0
  %196 = vmatprep.mubr.bf16.mxu0 0
  %197 = vmatmul.mubr.bf16.gmra.mrb[0].mxu0 %v93
  %v198 = vpop.f32.mrb[0].mxu0
  %v199 = vadd.f32 %v58, %v198
  %v200 = vpop.f32.mrb[0].mxu0
  %v201 = vpop.f32.mrb[0].mxu0
  %v202 = vadd.f32 %v58, %v201
  %v203 = vpop.f32.mrb[0].mxu0
  %204 = vmatprep.mubr.bf16.mxu0 0
  %205 = vmatmul.mubr.bf16.gmra.mrb[0].mxu0 %v94
  %v206 = vpop.f32.mrb[0].mxu0
  %v207 = vadd.f32 %v58, %v206
  %v208 = vpop.f32.mrb[0].mxu0
  %v209 = vpop.f32.mrb[0].mxu0
  %v210 = vadd.f32 %v58, %v209
  %v211 = vpop.f32.mrb[0].mxu0
  %212 = vmatprep.mubr.bf16.mxu0 0
  %213 = vmatmul.mubr.bf16.gmra.mrb[0].mxu0 %v95
  %v214 = vpop.f32.mrb[0].mxu0
  %v215 = vadd.f32 %v58, %v214
  %v216 = vpop.f32.mrb[0].mxu0
  %v217 = vpop.f32.mrb[0].mxu0
  %v218 = vadd.f32 %v58, %v217
  %v219 = vpop.f32.mrb[0].mxu0
  %220 = vmatprep.mubr.bf16.mxu0 0
  %221 = vmatmul.mubr.bf16.gmra.mrb[0].mxu0 %v96
  %v222 = vpop.f32.mrb[0].mxu0
  %v223 = vadd.f32 %v58, %v222
  %v224 = vpop.f32.mrb[0].mxu0
  %v225 = vpop.f32.mrb[0].mxu0
  %v226 = vadd.f32 %v58, %v225
  %v227 = vpop.f32.mrb[0].mxu0
  %228 = vmatprep.mubr.bf16.mxu0 0
  %229 = vmatmul.mubr.bf16.gmra.mrb[0].mxu0 %v97
  %v230 = vpop.f32.mrb[0].mxu0
  %v231 = vadd.f32 %v58, %v230
  %v232 = vpop.f32.mrb[0].mxu0
  %v233 = vpop.f32.mrb[0].mxu0
  %v234 = vadd.f32 %v58, %v233
  %v235 = vpop.f32.mrb[0].mxu0
  %236 = vmatprep.mubr.bf16.mxu0 0
  %237 = vmatmul.mubr.bf16.gmra.mrb[0].mxu0 %v98
  %v238 = vpop.f32.mrb[0].mxu0
  %v239 = vadd.f32 %v58, %v238
  %v240 = vpop.f32.mrb[0].mxu0
  %v241 = vpop.f32.mrb[0].mxu0
  %v242 = vadd.f32 %v58, %v241
  %v243 = vpop.f32.mrb[0].mxu0
  %244 = vmatprep.mubr.bf16.mxu0 0
  %245 = vmatmul.mubr.bf16.gmra.mrb[0].mxu0 %v99
  %v246 = vpop.f32.mrb[0].mxu0
  %v247 = vadd.f32 %v58, %v246
  %v248 = vpop.f32.mrb[0].mxu0
  %v249 = vpop.f32.mrb[0].mxu0
  %v250 = vadd.f32 %v58, %v249
  %v251 = vpop.f32.mrb[0].mxu0
  %252 = vdwg.mxu0
  %v253 = vmax.f32 %v191, 0.0
  %v254 = vmax.f32 %v194, 0.0
  %v255 = vmax.f32 %v199, 0.0
  %v256 = vmax.f32 %v202, 0.0
  %v257 = vmax.f32 %v207, 0.0
  %v258 = vmax.f32 %v210, 0.0
  %v259 = vmax.f32 %v215, 0.0
  %v260 = vmax.f32 %v218, 0.0
  %v261 = vmax.f32 %v223, 0.0
  %v262 = vmax.f32 %v226, 0.0
  %v263 = vmax.f32 %v231, 0.0
  %v264 = vmax.f32 %v234, 0.0
  %v265 = vmax.f32 %v239, 0.0
  %v266 = vmax.f32 %v242, 0.0
  %v267 = vmax.f32 %v247, 0.0
  %v268 = vmax.f32 %v250, 0.0
  %v269 = vld [vmem:[%s3] sm:$0x1]
  %v271 = vlaneseq
  %v272 = vshrl.u32 %v271, 7
  %v273 = vsub.s32 0, %v272
  %v274 = vrot.slane %v269, %v273
  %v276 = vmul.f32 %v253, %v274
  %v277 = vmul.f32 %v254, %v274
  %v278 = vmul.f32 %v255, %v274
  %v279 = vmul.f32 %v256, %v274
  %v280 = vmul.f32 %v257, %v274
  %v281 = vmul.f32 %v258, %v274
  %v282 = vmul.f32 %v259, %v274
  %v283 = vmul.f32 %v260, %v274
  %v284 = vmul.f32 %v261, %v274
  %v285 = vmul.f32 %v262, %v274
  %v286 = vmul.f32 %v263, %v274
  %v287 = vmul.f32 %v264, %v274
  %v288 = vmul.f32 %v265, %v274
  %v289 = vmul.f32 %v266, %v274
  %v290 = vmul.f32 %v267, %v274
  %v291 = vmul.f32 %v268, %v274
  %v292 = vld [vmem:[%s4] sm:$0x1]
  %v294 = vlaneseq
  %v295 = vshrl.u32 %v294, 7
  %v296 = vsub.s32 0, %v295
  %v297 = vrot.slane %v292, %v296
  %v299 = vadd.f32 %v276, %v297
  %v300 = vadd.f32 %v277, %v297
  %v301 = vadd.f32 %v278, %v297
  %v302 = vadd.f32 %v279, %v297
  %v303 = vadd.f32 %v280, %v297
  %v304 = vadd.f32 %v281, %v297
  %v305 = vadd.f32 %v282, %v297
  %v306 = vadd.f32 %v283, %v297
  %v307 = vadd.f32 %v284, %v297
  %v308 = vadd.f32 %v285, %v297
  %v309 = vadd.f32 %v286, %v297
  %v310 = vadd.f32 %v287, %v297
  %v311 = vadd.f32 %v288, %v297
  %v312 = vadd.f32 %v289, %v297
  %v313 = vadd.f32 %v290, %v297
  %v314 = vadd.f32 %v291, %v297
  %315 = vst [vmem:[%s5] sm:$0xff] %v299
  %316 = vst [vmem:[%s5 + $0x8] sm:$0xff] %v300
  %317 = vst [vmem:[%s5 + $0x10] sm:$0xff] %v301
  %318 = vst [vmem:[%s5 + $0x18] sm:$0xff] %v302
  %319 = vst [vmem:[%s5 + $0x20] sm:$0xff] %v303
  %320 = vst [vmem:[%s5 + $0x28] sm:$0xff] %v304
  %321 = vst [vmem:[%s5 + $0x30] sm:$0xff] %v305
  %322 = vst [vmem:[%s5 + $0x38] sm:$0xff] %v306
  %323 = vst [vmem:[%s5 + $0x40] sm:$0xff] %v307
  %324 = vst [vmem:[%s5 + $0x48] sm:$0xff] %v308
  %325 = vst [vmem:[%s5 + $0x50] sm:$0xff] %v309
  %326 = vst [vmem:[%s5 + $0x58] sm:$0xff] %v310
  %327 = vst [vmem:[%s5 + $0x60] sm:$0xff] %v311
  %328 = vst [vmem:[%s5 + $0x68] sm:$0xff] %v312
  %329 = vst [vmem:[%s5 + $0x70] sm:$0xff] %v313
  %330 = vst [vmem:[%s5 + $0x78] sm:$0xff] %v314
  // Predicated region
  $region22: #{net4_forward.13} parent=0 // pred_check
    _
  $region23: #{net4_forward.13} parent=0 // pred_check_branch
    %332 = sbr.rel (0) target = $region25
  $region24: #{net4_forward.13} parent=0 // pred_region
    _
  $region25: #{net4_forward.13} parent=0 // pred_fallthru
    _
  // Predicated region
  $region26: #{net4_forward.13} parent=0 // pred_check
    _
  $region27: #{net4_forward.13} parent=0 // pred_check_branch
    %334 = sbr.rel (0) target = $region29
  $region28: #{net4_forward.13} parent=0 // pred_region
    _
  $region29: #{net4_forward.13} parent=0 // pred_fallthru
    _

// kernel: net4_forward.15
$region0: #{net4_forward.15}
  #allocation0 [shape = 'u32[]', space=smem, size = 0x4, offset = 0x4, fixed_abs, tag = 'smem constant byte address 0x4 - core index']
  #allocation1 [shape = 'u32[144,128]{1,0:T(1,128)}', space=vmem, size = 0x12000, scoped, tag = 'internal scratch']
  %s0 = inlined_call_operand.vmem [shape: bf16[32,128], index: 0, kind: input, shape index: {}]
  %s1 = inlined_call_operand.vmem [shape: bf16[128,128], index: 1, kind: input, shape index: {}]
  %s2 = inlined_call_operand.vmem [shape: f32[1,128], index: 2, kind: input, shape index: {}]
  %s3 = inlined_call_operand.vmem [shape: f32[1,128], index: 3, kind: input, shape index: {}]
  %s4 = inlined_call_operand.vmem [shape: f32[1,128], index: 4, kind: input, shape index: {}]
  %s5 = inlined_call_operand.vmem [shape: f32[32,128], index: 5, kind: output, shape index: {}]
  %s6 = sld [smem:[#allocation0]]
  $region30: #{net4_forward.15} parent=0
    _
  %s8 = ssub.s32 1, %s6
  %s9 = scalar_select 0, %s8, %s6
  // Predicated region
  $region2: #{net4_forward.15} parent=0 // pred_check
    _
  $region3: #{net4_forward.15} parent=0 // pred_check_branch
    %11 = sbr.rel (0) target = $region5
  $region4: #{net4_forward.15} parent=0 // pred_region
    _
  $region5: #{net4_forward.15} parent=0 // pred_fallthru
    _
  // Predicated region
  $region6: #{net4_forward.15} parent=0 // pred_check
    _
  $region7: #{net4_forward.15} parent=0 // pred_check_branch
    %13 = sbr.rel (0) target = $region9
  $region8: #{net4_forward.15} parent=0 // pred_region
    _
  $region9: #{net4_forward.15} parent=0 // pred_fallthru
    _
  // Predicated region
  $region10: #{net4_forward.15} parent=0 // pred_check
    _
  $region11: #{net4_forward.15} parent=0 // pred_check_branch
    %15 = sbr.rel (0) target = $region13
  $region12: #{net4_forward.15} parent=0 // pred_region
    _
  $region13: #{net4_forward.15} parent=0 // pred_fallthru
    _
  // Predicated region
  $region14: #{net4_forward.15} parent=0 // pred_check
    _
  $region15: #{net4_forward.15} parent=0 // pred_check_branch
    %17 = sbr.rel (0) target = $region17
  $region16: #{net4_forward.15} parent=0 // pred_region
    _
  $region17: #{net4_forward.15} parent=0 // pred_fallthru
    _
  // Predicated region
  $region18: #{net4_forward.15} parent=0 // pred_check
    _
  $region19: #{net4_forward.15} parent=0 // pred_check_branch
    %19 = sbr.rel (0) target = $region21
  $region20: #{net4_forward.15} parent=0 // pred_region
    _
  $region21: #{net4_forward.15} parent=0 // pred_fallthru
    _
  %v21 = vld [vmem:[%s0] sm:$0xf]
  %v22 = vld [vmem:[%s0 + $0x4] sm:$0xf]
  %v23 = vld [vmem:[%s0 + $0x8] sm:$0xf]
  %v24 = vld [vmem:[%s0 + $0xc] sm:$0xf]
  %v25 = vld [vmem:[%s1] sm:$0xf]
  %v26 = vld [vmem:[%s1 + $0x4] sm:$0xf]
  %v27 = vld [vmem:[%s1 + $0x8] sm:$0xf]
  %v28 = vld [vmem:[%s1 + $0xc] sm:$0xf]
  %v29 = vld [vmem:[%s1 + $0x10] sm:$0xf]
  %v30 = vld [vmem:[%s1 + $0x14] sm:$0xf]
  %v31 = vld [vmem:[%s1 + $0x18] sm:$0xf]
  %v32 = vld [vmem:[%s1 + $0x1c] sm:$0xf]
  %v33 = vld [vmem:[%s1 + $0x20] sm:$0xf]
  %v34 = vld [vmem:[%s1 + $0x24] sm:$0xf]
  %v35 = vld [vmem:[%s1 + $0x28] sm:$0xf]
  %v36 = vld [vmem:[%s1 + $0x2c] sm:$0xf]
  %v37 = vld [vmem:[%s1 + $0x30] sm:$0xf]
  %v38 = vld [vmem:[%s1 + $0x34] sm:$0xf]
  %v39 = vld [vmem:[%s1 + $0x38] sm:$0xf]
  %v40 = vld [vmem:[%s1 + $0x3c] sm:$0xf]
  %v41 = vld [vmem:[%s2] sm:$0x1]
  %v43 = vlaneseq
  %v44 = vshrl.u32 %v43, 7
  %v45 = vsub.s32 0, %v44
  %v46 = vrot.slane %v41, %v45
  %v52 = vunpack.c.l.b16 %v21
  %v53 = vunpack.c.l.b16 %v22
  %v54 = vunpack.c.l.b16 %v23
  %v55 = vunpack.c.l.b16 %v24
  %v56 = vpack.c.b16 %v53, %v52
  %v57 = vpack.c.b16 %v55, %v54
  %v76 = vunpack.c.l.b16 %v25
  %v77 = vunpack.c.l.b16 %v26
  %v78 = vunpack.c.l.b16 %v27
  %v79 = vunpack.c.l.b16 %v28
  %v80 = vunpack.c.l.b16 %v29
  %v81 = vunpack.c.l.b16 %v30
  %v82 = vunpack.c.l.b16 %v31
  %v83 = vunpack.c.l.b16 %v32
  %v84 = vunpack.c.l.b16 %v33
  %v85 = vunpack.c.l.b16 %v34
  %v86 = vunpack.c.l.b16 %v35
  %v87 = vunpack.c.l.b16 %v36
  %v88 = vunpack.c.l.b16 %v37
  %v89 = vunpack.c.l.b16 %v38
  %v90 = vunpack.c.l.b16 %v39
  %v91 = vunpack.c.l.b16 %v40
  %v92 = vpack.c.b16 %v77, %v76
  %v93 = vpack.c.b16 %v79, %v78
  %v94 = vpack.c.b16 %v81, %v80
  %v95 = vpack.c.b16 %v83, %v82
  %v96 = vpack.c.b16 %v85, %v84
  %v97 = vpack.c.b16 %v87, %v86
  %v98 = vpack.c.b16 %v89, %v88
  %v99 = vpack.c.b16 %v91, %v90
  %108 = vmatprep.subr.bf16.mxu0 0
  %109 = vmatpush1.bf16.msra.mxu0 %v92
  %110 = vmatprep.subr.bf16.mxu0 0
  %111 = vmatpush1.bf16.msra.mxu0 %v93
  %112 = vmatprep.subr.bf16.mxu0 0
  %113 = vmatpush1.bf16.msra.mxu0 %v94
  %114 = vmatprep.subr.bf16.mxu0 0
  %115 = vmatpush1.bf16.msra.mxu0 %v95
  %116 = vmatprep.subr.bf16.mxu0 0
  %117 = vmatpush1.bf16.msra.mxu0 %v96
  %118 = vmatprep.subr.bf16.mxu0 0
  %119 = vmatpush1.bf16.msra.mxu0 %v97
  %120 = vmatprep.subr.bf16.mxu0 0
  %121 = vmatpush1.bf16.msra.mxu0 %v98
  %122 = vmatprep.subr.bf16.mxu0 0
  %123 = vmatpush1.bf16.msra.mxu0 %v99
  %124 = vmatprep.subr.bf16.mxu0 0
  %125 = vmatpush1.bf16.msra.mxu0 0
  %126 = vmatprep.subr.bf16.mxu0 0
  %127 = vmatpush1.bf16.msra.mxu0 0
  %128 = vmatprep.subr.bf16.mxu0 0
  %129 = vmatpush1.bf16.msra.mxu0 0
  %130 = vmatprep.subr.bf16.mxu0 0
  %131 = vmatpush1.bf16.msra.mxu0 0
  %132 = vmatprep.subr.bf16.mxu0 0
  %133 = vmatpush1.bf16.msra.mxu0 0
  %134 = vmatprep.subr.bf16.mxu0 0
  %135 = vmatpush1.bf16.msra.mxu0 0
  %136 = vmatprep.subr.bf16.mxu0 0
  %137 = vmatpush1.bf16.msra.mxu0 0
  %138 = vmatprep.subr.bf16.mxu0 0
  %139 = vmatpush1.bf16.msra.mxu0 0
  %140 = vmatprep.mubr.bf16.mxu0 0
  %141 = vmatmul.mubr.bf16.gmra.mrb[0].mxu0 %v56
  %v142 = vpop.f32.mrb[0].mxu0
  %v143 = vadd.f32 %v46, %v142
  %v144 = vpop.f32.mrb[0].mxu0
  %v145 = vpop.f32.mrb[0].mxu0
  %v146 = vadd.f32 %v46, %v145
  %v147 = vpop.f32.mrb[0].mxu0
  %148 = vmatprep.mubr.bf16.mxu0 0
  %149 = vmatmul.mubr.bf16.gmra.mrb[0].mxu0 %v57
  %v150 = vpop.f32.mrb[0].mxu0
  %v151 = vadd.f32 %v46, %v150
  %v152 = vpop.f32.mrb[0].mxu0
  %v153 = vpop.f32.mrb[0].mxu0
  %v154 = vadd.f32 %v46, %v153
  %v155 = vpop.f32.mrb[0].mxu0
  %156 = vdwg.mxu0
  %v157 = vmax.f32 %v143, 0.0
  %v158 = vmax.f32 %v146, 0.0
  %v159 = vmax.f32 %v151, 0.0
  %v160 = vmax.f32 %v154, 0.0
  %v161 = vld [vmem:[%s3] sm:$0x1]
  %v163 = vlaneseq
  %v164 = vshrl.u32 %v163, 7
  %v165 = vsub.s32 0, %v164
  %v166 = vrot.slane %v161, %v165
  %v168 = vmul.f32 %v157, %v166
  %v169 = vmul.f32 %v158, %v166
  %v170 = vmul.f32 %v159, %v166
  %v171 = vmul.f32 %v160, %v166
  %v172 = vld [vmem:[%s4] sm:$0x1]
  %v174 = vlaneseq
  %v175 = vshrl.u32 %v174, 7
  %v176 = vsub.s32 0, %v175
  %v177 = vrot.slane %v172, %v176
  %v179 = vadd.f32 %v168, %v177
  %v180 = vadd.f32 %v169, %v177
  %v181 = vadd.f32 %v170, %v177
  %v182 = vadd.f32 %v171, %v177
  %183 = vst [vmem:[%s5] sm:$0xff] %v179
  %184 = vst [vmem:[%s5 + $0x8] sm:$0xff] %v180
  %185 = vst [vmem:[%s5 + $0x10] sm:$0xff] %v181
  %186 = vst [vmem:[%s5 + $0x18] sm:$0xff] %v182
  // Predicated region
  $region22: #{net4_forward.15} parent=0 // pred_check
    _
  $region23: #{net4_forward.15} parent=0 // pred_check_branch
    %188 = sbr.rel (0) target = $region25
  $region24: #{net4_forward.15} parent=0 // pred_region
    _
  $region25: #{net4_forward.15} parent=0 // pred_fallthru
    _
  // Predicated region
  $region26: #{net4_forward.15} parent=0 // pred_check
    _
  $region27: #{net4_forward.15} parent=0 // pred_check_branch
    %190 = sbr.rel (0) target = $region29
  $region28: #{net4_forward.15} parent=0 // pred_region
    _
  $region29: #{net4_forward.15} parent=0 // pred_fallthru
    _

// kernel: net4_forward.17
$region0: #{net4_forward.17}
  #allocation0 [shape = 'u32[]', space=smem, size = 0x4, offset = 0x4, fixed_abs, tag = 'smem constant byte address 0x4 - core index']
  #allocation1 [shape = 'u32[144,128]{1,0:T(1,128)}', space=vmem, size = 0x12000, scoped, tag = 'internal scratch']
  %s0 = inlined_call_operand.vmem [shape: bf16[32,128], index: 0, kind: input, shape index: {}]
  %s1 = inlined_call_operand.vmem [shape: bf16[128,128], index: 1, kind: input, shape index: {}]
  %s2 = inlined_call_operand.vmem [shape: f32[1,128], index: 2, kind: input, shape index: {}]
  %s3 = inlined_call_operand.vmem [shape: f32[32,128], index: 3, kind: output, shape index: {}]
  %s4 = sld [smem:[#allocation0]]
  $region22: #{net4_forward.17} parent=0
    _
  %s6 = ssub.s32 1, %s4
  %s7 = scalar_select 0, %s6, %s4
  // Predicated region
  $region2: #{net4_forward.17} parent=0 // pred_check
    _
  $region3: #{net4_forward.17} parent=0 // pred_check_branch
    %9 = sbr.rel (0) target = $region5
  $region4: #{net4_forward.17} parent=0 // pred_region
    _
  $region5: #{net4_forward.17} parent=0 // pred_fallthru
    _
  // Predicated region
  $region6: #{net4_forward.17} parent=0 // pred_check
    _
  $region7: #{net4_forward.17} parent=0 // pred_check_branch
    %11 = sbr.rel (0) target = $region9
  $region8: #{net4_forward.17} parent=0 // pred_region
    _
  $region9: #{net4_forward.17} parent=0 // pred_fallthru
    _
  // Predicated region
  $region10: #{net4_forward.17} parent=0 // pred_check
    _
  $region11: #{net4_forward.17} parent=0 // pred_check_branch
    %13 = sbr.rel (0) target = $region13
  $region12: #{net4_forward.17} parent=0 // pred_region
    _
  $region13: #{net4_forward.17} parent=0 // pred_fallthru
    _
  %v15 = vld [vmem:[%s0] sm:$0xf]
  %v16 = vld [vmem:[%s0 + $0x4] sm:$0xf]
  %v17 = vld [vmem:[%s0 + $0x8] sm:$0xf]
  %v18 = vld [vmem:[%s0 + $0xc] sm:$0xf]
  %v19 = vld [vmem:[%s1] sm:$0xf]
  %v20 = vld [vmem:[%s1 + $0x4] sm:$0xf]
  %v21 = vld [vmem:[%s1 + $0x8] sm:$0xf]
  %v22 = vld [vmem:[%s1 + $0xc] sm:$0xf]
  %v23 = vld [vmem:[%s1 + $0x10] sm:$0xf]
  %v24 = vld [vmem:[%s1 + $0x14] sm:$0xf]
  %v25 = vld [vmem:[%s1 + $0x18] sm:$0xf]
  %v26 = vld [vmem:[%s1 + $0x1c] sm:$0xf]
  %v27 = vld [vmem:[%s1 + $0x20] sm:$0xf]
  %v28 = vld [vmem:[%s1 + $0x24] sm:$0xf]
  %v29 = vld [vmem:[%s1 + $0x28] sm:$0xf]
  %v30 = vld [vmem:[%s1 + $0x2c] sm:$0xf]
  %v31 = vld [vmem:[%s1 + $0x30] sm:$0xf]
  %v32 = vld [vmem:[%s1 + $0x34] sm:$0xf]
  %v33 = vld [vmem:[%s1 + $0x38] sm:$0xf]
  %v34 = vld [vmem:[%s1 + $0x3c] sm:$0xf]
  %v35 = vld [vmem:[%s2] sm:$0x1]
  %v37 = vlaneseq
  %v38 = vshrl.u32 %v37, 7
  %v39 = vsub.s32 0, %v38
  %v40 = vrot.slane %v35, %v39
  %v46 = vunpack.c.l.b16 %v15
  %v47 = vunpack.c.l.b16 %v16
  %v48 = vunpack.c.l.b16 %v17
  %v49 = vunpack.c.l.b16 %v18
  %v50 = vpack.c.b16 %v47, %v46
  %v51 = vpack.c.b16 %v49, %v48
  %v70 = vunpack.c.l.b16 %v19
  %v71 = vunpack.c.l.b16 %v20
  %v72 = vunpack.c.l.b16 %v21
  %v73 = vunpack.c.l.b16 %v22
  %v74 = vunpack.c.l.b16 %v23
  %v75 = vunpack.c.l.b16 %v24
  %v76 = vunpack.c.l.b16 %v25
  %v77 = vunpack.c.l.b16 %v26
  %v78 = vunpack.c.l.b16 %v27
  %v79 = vunpack.c.l.b16 %v28
  %v80 = vunpack.c.l.b16 %v29
  %v81 = vunpack.c.l.b16 %v30
  %v82 = vunpack.c.l.b16 %v31
  %v83 = vunpack.c.l.b16 %v32
  %v84 = vunpack.c.l.b16 %v33
  %v85 = vunpack.c.l.b16 %v34
  %v86 = vpack.c.b16 %v71, %v70
  %v87 = vpack.c.b16 %v73, %v72
  %v88 = vpack.c.b16 %v75, %v74
  %v89 = vpack.c.b16 %v77, %v76
  %v90 = vpack.c.b16 %v79, %v78
  %v91 = vpack.c.b16 %v81, %v80
  %v92 = vpack.c.b16 %v83, %v82
  %v93 = vpack.c.b16 %v85, %v84
  %102 = vmatprep.subr.bf16.mxu0 0
  %103 = vmatpush1.bf16.msra.mxu0 %v86
  %104 = vmatprep.subr.bf16.mxu0 0
  %105 = vmatpush1.bf16.msra.mxu0 %v87
  %106 = vmatprep.subr.bf16.mxu0 0
  %107 = vmatpush1.bf16.msra.mxu0 %v88
  %108 = vmatprep.subr.bf16.mxu0 0
  %109 = vmatpush1.bf16.msra.mxu0 %v89
  %110 = vmatprep.subr.bf16.mxu0 0
  %111 = vmatpush1.bf16.msra.mxu0 %v90
  %112 = vmatprep.subr.bf16.mxu0 0
  %113 = vmatpush1.bf16.msra.mxu0 %v91
  %114 = vmatprep.subr.bf16.mxu0 0
  %115 = vmatpush1.bf16.msra.mxu0 %v92
  %116 = vmatprep.subr.bf16.mxu0 0
  %117 = vmatpush1.bf16.msra.mxu0 %v93
  %118 = vmatprep.subr.bf16.mxu0 0
  %119 = vmatpush1.bf16.msra.mxu0 0
  %120 = vmatprep.subr.bf16.mxu0 0
  %121 = vmatpush1.bf16.msra.mxu0 0
  %122 = vmatprep.subr.bf16.mxu0 0
  %123 = vmatpush1.bf16.msra.mxu0 0
  %124 = vmatprep.subr.bf16.mxu0 0
  %125 = vmatpush1.bf16.msra.mxu0 0
  %126 = vmatprep.subr.bf16.mxu0 0
  %127 = vmatpush1.bf16.msra.mxu0 0
  %128 = vmatprep.subr.bf16.mxu0 0
  %129 = vmatpush1.bf16.msra.mxu0 0
  %130 = vmatprep.subr.bf16.mxu0 0
  %131 = vmatpush1.bf16.msra.mxu0 0
  %132 = vmatprep.subr.bf16.mxu0 0
  %133 = vmatpush1.bf16.msra.mxu0 0
  %134 = vmatprep.mubr.bf16.mxu0 0
  %135 = vmatmul.mubr.bf16.gmra.mrb[0].mxu0 %v50
  %v136 = vpop.f32.mrb[0].mxu0
  %v137 = vadd.f32 %v40, %v136
  %v138 = vpop.f32.mrb[0].mxu0
  %v139 = vpop.f32.mrb[0].mxu0
  %v140 = vadd.f32 %v40, %v139
  %v141 = vpop.f32.mrb[0].mxu0
  %142 = vmatprep.mubr.bf16.mxu0 0
  %143 = vmatmul.mubr.bf16.gmra.mrb[0].mxu0 %v51
  %v144 = vpop.f32.mrb[0].mxu0
  %v145 = vadd.f32 %v40, %v144
  %v146 = vpop.f32.mrb[0].mxu0
  %v147 = vpop.f32.mrb[0].mxu0
  %v148 = vadd.f32 %v40, %v147
  %v149 = vpop.f32.mrb[0].mxu0
  %150 = vdwg.mxu0
  %v151 = vlaneseq
  %v152 = vand.u32 %v151, 127
  %vm153 = vcmp.lt.s32.totalorder %v152, 10
  %v154 = vsel %vm153, %v137, -1e+30
  %v155 = vsel %vm153, %v140, -1e+30
  %v156 = vsel %vm153, %v145, -1e+30
  %v157 = vsel %vm153, %v148, -1e+30
  %158 = vmax.xlane.f32.xlu0 %v154
  %v159 = vpop.xlane.xlu0 %158
  %160 = vmax.xlane.f32.xlu0 %v155
  %v161 = vpop.xlane.xlu0 %160
  %162 = vmax.xlane.f32.xlu0 %v156
  %v163 = vpop.xlane.xlu0 %162
  %164 = vmax.xlane.f32.xlu0 %v157
  %v165 = vpop.xlane.xlu0 %164
  %v166 = vsub.f32 %v154, %v159
  %v167 = vsub.f32 %v155, %v161
  %v168 = vsub.f32 %v156, %v163
  %v169 = vsub.f32 %v157, %v165
  %v170 = vmul.f32 %v166, 1.442695
  %v171 = vpow.pop %v170
  %v172 = vmul.f32 %v167, 1.442695
  %v173 = vpow.pop %v172
  %v174 = vmul.f32 %v168, 1.442695
  %v175 = vpow.pop %v174
  %v176 = vmul.f32 %v169, 1.442695
  %v177 = vpow.pop %v176
  %178 = vadd.xlane.f32.xlu0 %v171
  %v179 = vpop.xlane.xlu0 %178
  %180 = vadd.xlane.f32.xlu0 %v173
  %v181 = vpop.xlane.xlu0 %180
  %182 = vadd.xlane.f32.xlu0 %v175
  %v183 = vpop.xlane.xlu0 %182
  %184 = vadd.xlane.f32.xlu0 %v177
  %v185 = vpop.xlane.xlu0 %184
  %v186 = vlog2.pop %v179
  %v187 = vmul.f32 %v186, 0.6931472
  %v188 = vlog2.pop %v181
  %v189 = vmul.f32 %v188, 0.6931472
  %v190 = vlog2.pop %v183
  %v191 = vmul.f32 %v190, 0.6931472
  %v192 = vlog2.pop %v185
  %v193 = vmul.f32 %v192, 0.6931472
  %v194 = vsub.f32 %v166, %v187
  %v195 = vsub.f32 %v167, %v189
  %v196 = vsub.f32 %v168, %v191
  %v197 = vsub.f32 %v169, %v193
  %198 = vst [vmem:[%s3] sm:$0xff] %v194
  %199 = vst [vmem:[%s3 + $0x8] sm:$0xff] %v195
  %200 = vst [vmem:[%s3 + $0x10] sm:$0xff] %v196
  %201 = vst [vmem:[%s3 + $0x18] sm:$0xff] %v197
  // Predicated region
  $region14: #{net4_forward.17} parent=0 // pred_check
    _
  $region15: #{net4_forward.17} parent=0 // pred_check_branch
    %203 = sbr.rel (0) target = $region17
  $region16: #{net4_forward.17} parent=0 // pred_region
    _
  $region17: #{net4_forward.17} parent=0 // pred_fallthru
    _
  // Predicated region
  $region18: #{net4_forward.17} parent=0 // pred_check
    _
  $region19: #{net4_forward.17} parent=0 // pred_check_branch
    %205 = sbr.rel (0) target = $region21
  $region20: #{net4_forward.17} parent=0 // pred_region
    _
  $region21: #{net4_forward.17} parent=0 // pred_fallthru
    _

</llo_original>
